<compile_context>
chip_gen: v6e
topology: v6e:2x2x1
jax: 0.10.0
libtpu: 0.0.40
codegen_flags: <defaults>
</compile_context>

<pallas_src>
import functools

import jax
import jax.numpy as jnp
from jax import lax
from jax.experimental import pallas as pl
from jax.experimental.pallas import tpu as pltpu

EPS = 1e-3


def _conv_pool_stats_kernel(f00_ref, f01_ref, f10_ref, f11_ref, w_ref, mask_ref,
                            y_ref, sum_ref, sq_ref, *, cc, s, w_out):
    """Pass 1 for one spatial band (one grid step).

    f{a}{b}_ref : (Cin, Qc)   stride-2 phase plane (a,b) of the zero-padded input,
                  flattened row-major over the (TB+1, OW+1) band grid (1-row/col halo).
    w_ref       : (9, Cc, Cin) conv taps, tap index = kh*3 + kw.
    mask_ref    : (1, Qc)      1.0 on valid output positions, 0.0 on halo/junk.
    y_ref       : (C, Qc)      pre-BN output band ([conv channels, pooled channels]).
    sum_ref     : (C, 1)       per-channel sum, accumulated across the grid.
    sq_ref      : (C, 1)       per-channel sum of squares, accumulated across the grid.
    """
    @pl.when(pl.program_id(0) == 0)
    def _init():
        sum_ref[...] = jnp.zeros_like(sum_ref)
        sq_ref[...] = jnp.zeros_like(sq_ref)

    phases = {(0, 0): f00_ref, (0, 1): f01_ref,
              (1, 0): f10_ref, (1, 1): f11_ref}

    # 3x3 / stride-2 conv: nine small MXU matmuls on shifted views of the phase planes.
    conv = jnp.zeros((cc, w_out), jnp.float32)
    for kh in range(3):
        for kw in range(3):
            off = (kh // 2) * s + (kw // 2)
            tap = phases[(kh % 2, kw % 2)][:, off:off + w_out]        # (Cin, w_out)
            conv = conv + jnp.dot(w_ref[kh * 3 + kw], tap,
                                  preferred_element_type=jnp.float32)

    # 2x2 / stride-2 max-pool: its four candidates are exactly the (kh,kw) in {1,2}^2 taps.
    p11 = f11_ref[:, 0:w_out]
    p12 = f10_ref[:, 1:1 + w_out]
    p21 = f01_ref[:, s:s + w_out]
    p22 = f00_ref[:, s + 1:s + 1 + w_out]
    pool = jnp.maximum(jnp.maximum(p11, p12), jnp.maximum(p21, p22))

    # Channel order of the PyTorch concat: [conv channels, pooled input channels].
    y = jnp.concatenate([conv, pool], axis=0)              # (C, w_out)
    ym = y * mask_ref[:, 0:w_out]                          # zero the junk (halo) positions

    y_ref[:, 0:w_out] = ym
    tail = y_ref.shape[1] - w_out
    y_ref[:, w_out:] = jnp.zeros((y_ref.shape[0], tail), y_ref.dtype)

    sum_ref[...] += jnp.sum(ym, axis=1, keepdims=True)
    sq_ref[...] += jnp.sum(ym * ym, axis=1, keepdims=True)


def _bn_relu_kernel(y_ref, sum_ref, sq_ref, gamma_ref, beta_ref, out_ref, *, count):
    """Pass 2: training-mode BN (global batch stats) + affine + ReLU, elementwise per tile."""
    inv_n = 1.0 / count
    mean = sum_ref[...] * inv_n                         # (C, 1)
    var = sq_ref[...] * inv_n - mean * mean             # biased variance
    scale = gamma_ref[...] * lax.rsqrt(var + EPS)       # (C, 1), broadcast over lanes
    shift = beta_ref[...] - mean * scale
    out_ref[...] = jnp.maximum(y_ref[...] * scale + shift, 0.0)


def _pick_tile_rows(oh, ow, cin, c):
    """Largest divisor TB of OH whose double-buffered band working set stays small."""
    budget = 8 * 1024 * 1024          # bytes; conservative so v7x (64 MiB VMEM) never gets tight
    best = 1
    for tb in range(1, oh + 1):
        if oh % tb:
            continue
        band_bytes = (tb + 1) * (ow + 1) * (4 * cin + 2 * c) * 4   # 4 phases + y in/out
        if 2 * band_bytes <= budget:                               # x2 for double buffering
            best = tb
    return best


@functools.partial(jax.jit, static_argnames=("tile_rows",))
def downsampler_block(x, conv_w, conv_b, bn_gamma, bn_beta, *, tile_rows=None):
    """x: (N, Cin, H, W) float32 NCHW.  Returns (N, Cc+Cin, H//2, W//2) float32 NCHW."""
    del conv_b   # exactly cancelled by the training-mode BN mean subtraction
    N, Cin, H, W = x.shape
    Cc = conv_w.shape[0]
    C = Cc + Cin
    assert H % 2 == 0 and W % 2 == 0, "even spatial dims expected (RegSeg sizes)"
    OH, OW = H // 2, W // 2

    TB = tile_rows if tile_rows is not None else _pick_tile_rows(OH, OW, Cin, C)
    assert OH % TB == 0, "tile_rows must divide H//2"
    nb = OH // TB                       # row-bands per image
    n_chunks = N * nb                   # grid extent of both passes
    S = OW + 1                          # row stride of a band plane
    Qc = (TB + 1) * S                   # flattened band-plane length (incl. halo row/col)
    w_out = TB * S - 1                  # columns actually computed per band

    # ---- glue: stride-2 phase planes of the zero-padded input, per band (1-row halo) ----
    xp = jnp.pad(x, ((0, 0), (0, 0), (1, 1), (1, 1)))      # the conv's zero padding

    def phase(a, b):
        bands = [xp[:, :, 2 * k * TB + a: 2 * k * TB + a + 2 * TB + 1: 2, b::2]
                 for k in range(nb)]                        # each (N, Cin, TB+1, OW+1)
        ph = jnp.stack(bands, axis=1)                       # (N, nb, Cin, TB+1, OW+1)
        return ph.reshape(n_chunks, Cin, Qc)

    f00, f01, f10, f11 = phase(0, 0), phase(0, 1), phase(1, 0), phase(1, 1)

    w_taps = conv_w.transpose(2, 3, 0, 1).reshape(9, Cc, Cin)           # tap = kh*3 + kw
    mask = jnp.zeros((TB + 1, S), jnp.float32).at[:TB, :OW].set(1.0).reshape(1, Qc)

    phase_spec = pl.BlockSpec((None, Cin, Qc), lambda c: (c, 0, 0))
    y_spec = pl.BlockSpec((None, C, Qc), lambda c: (c, 0, 0))
    stat_spec = pl.BlockSpec((C, 1), lambda c: (0, 0))

    y, ysum, ysq = pl.pallas_call(
        functools.partial(_conv_pool_stats_kernel, cc=Cc, s=S, w_out=w_out),
        out_shape=(jax.ShapeDtypeStruct((n_chunks, C, Qc), jnp.float32),
                   jax.ShapeDtypeStruct((C, 1), jnp.float32),
                   jax.ShapeDtypeStruct((C, 1), jnp.float32)),
        grid=(n_chunks,),
        in_specs=[phase_spec, phase_spec, phase_spec, phase_spec,
                  pl.BlockSpec((9, Cc, Cin), lambda c: (0, 0, 0)),
                  pl.BlockSpec((1, Qc), lambda c: (0, 0))],
        out_specs=(y_spec, stat_spec, stat_spec),
        compiler_params=pltpu.CompilerParams(
            dimension_semantics=("arbitrary",),          # stats accumulate across this axis
            vmem_limit_bytes=48 * 1024 * 1024),
    )(f00, f01, f10, f11, w_taps, mask)

    count = float(N * OH * OW)
    out = pl.pallas_call(
        functools.partial(_bn_relu_kernel, count=count),
        out_shape=jax.ShapeDtypeStruct((n_chunks, C, Qc), jnp.float32),
        grid=(n_chunks,),
        in_specs=[y_spec, stat_spec, stat_spec, stat_spec, stat_spec],
        out_specs=y_spec,
        compiler_params=pltpu.CompilerParams(
            dimension_semantics=("parallel",),           # independent tiles -> megacore on v7x
            vmem_limit_bytes=48 * 1024 * 1024),
    )(y, ysum, ysq, bn_gamma.reshape(C, 1), bn_beta.reshape(C, 1))

    # ---- glue: drop halo/junk positions and restore NCHW --------------------------------
    out = out.reshape(N, nb, C, TB + 1, S)[:, :, :, :TB, :OW]   # (N, nb, C, TB, OW)
    return out.transpose(0, 2, 1, 3, 4).reshape(N, C, OH, OW)


def reference(x, conv_w, conv_b, bn_gamma, bn_beta):
    """Pure-JAX reference of the PyTorch forward (training-mode BN)."""
    conv = lax.conv_general_dilated(
        x, conv_w, window_strides=(2, 2), padding=((1, 1), (1, 1)),
        dimension_numbers=("NCHW", "OIHW", "NCHW")) + conv_b.reshape(1, -1, 1, 1)
    pool = lax.reduce_window(x, -jnp.inf, lax.max,
                             window_dimensions=(1, 1, 2, 2),
                             window_strides=(1, 1, 2, 2), padding="VALID")
    y = jnp.concatenate([conv, pool], axis=1)
    mean = jnp.mean(y, axis=(0, 2, 3), keepdims=True)
    var = jnp.mean((y - mean) ** 2, axis=(0, 2, 3), keepdims=True)  # biased
    y_hat = (y - mean) * lax.rsqrt(var + EPS)
    y_hat = y_hat * bn_gamma.reshape(1, -1, 1, 1) + bn_beta.reshape(1, -1, 1, 1)
    return jnp.maximum(y_hat, 0.0)


if __name__ == "__main__":
    # Small deterministic example:  ninput=4, noutput=8, 16x16 spatial, batch 2.
    N, Cin, H, W = 2, 4, 16, 16
    noutput = 8
    Cc = noutput - Cin

    key = jax.random.PRNGKey(0)
    kx, kw, kb, kg, kbe = jax.random.split(key, 5)
    x = jax.random.normal(kx, (N, Cin, H, W), jnp.float32)
    conv_w = 0.1 * jax.random.normal(kw, (Cc, Cin, 3, 3), jnp.float32)
    conv_b = 0.1 * jax.random.normal(kb, (Cc,), jnp.float32)
    bn_gamma = 1.0 + 0.1 * jax.random.normal(kg, (noutput,), jnp.float32)
    bn_beta = 0.1 * jax.random.normal(kbe, (noutput,), jnp.float32)
    # TODO(synk): BatchNorm running_mean/running_var buffer updates (stateful side effect
    # of the training-mode forward) are not replicated; they do not affect the output.

    # tile_rows=4 -> 2 row-bands per image, 4 grid steps: exercises the tiled stats
    # accumulation + two-pass BN path (tile_rows=None auto-picks for large inputs).
    out = downsampler_block(x, conv_w, conv_b, bn_gamma, bn_beta, tile_rows=4)
    out = jax.block_until_ready(out)

    ref = reference(x, conv_w, conv_b, bn_gamma, bn_beta)
    assert out.shape == (N, noutput, H // 2, W // 2), out.shape
    assert out.dtype == jnp.float32
    err = float(jnp.max(jnp.abs(out - ref)))
    assert jnp.allclose(out, ref, atol=2e-4, rtol=2e-4), err

    print("KERNEL_OK")
</pallas_src>

<mosaic_0001>
module attributes {stable_mosaic.version = 11 : i64} {
  func.func @_conv_pool_stats_kernel(%arg0: i32, %arg1: memref<1x4x45xf32, #tpu.memory_space<vmem>>, %arg2: memref<1x4x45xf32, #tpu.memory_space<vmem>>, %arg3: memref<1x4x45xf32, #tpu.memory_space<vmem>>, %arg4: memref<1x4x45xf32, #tpu.memory_space<vmem>>, %arg5: memref<9x4x4xf32, #tpu.memory_space<vmem>>, %arg6: memref<1x45xf32, #tpu.memory_space<vmem>>, %arg7: memref<1x8x45xf32, #tpu.memory_space<vmem>>, %arg8: memref<8x1xf32, #tpu.memory_space<vmem>>, %arg9: memref<8x1xf32, #tpu.memory_space<vmem>>) attributes {dimension_semantics = [#tpu.dimension_semantics<arbitrary>], iteration_bounds = array<i64: 4>, scalar_prefetch = 0 : i64, scratch_operands = 0 : i64, tpu.core_type = #tpu.core_type<tc>, window_params = [{transform_indices = @transform_0, window_bounds = array<i64: 1, 4, 45>}, {transform_indices = @transform_1, window_bounds = array<i64: 1, 4, 45>}, {transform_indices = @transform_2, window_bounds = array<i64: 1, 4, 45>}, {transform_indices = @transform_3, window_bounds = array<i64: 1, 4, 45>}, {pipeline_mode = #tpu.pipeline_mode<synchronous>, transform_indices = @transform_4, window_bounds = array<i64: 9, 4, 4>}, {pipeline_mode = #tpu.pipeline_mode<synchronous>, transform_indices = @transform_5, window_bounds = array<i64: 1, 45>}, {transform_indices = @transform_6, window_bounds = array<i64: 1, 8, 45>}, {pipeline_mode = #tpu.pipeline_mode<synchronous>, transform_indices = @transform_7, window_bounds = array<i64: 8, 1>}, {pipeline_mode = #tpu.pipeline_mode<synchronous>, transform_indices = @transform_8, window_bounds = array<i64: 8, 1>}]} {
    %c0_i32 = arith.constant 0 : i32
    %0 = arith.cmpi eq, %arg0, %c0_i32 : i32
    %1 = arith.extui %0 : i1 to i32
    %c0_i32_0 = arith.constant 0 : i32
    %2 = arith.cmpi ne, %1, %c0_i32_0 : i32
    scf.if %2 {
      %cst_83 = arith.constant 0.000000e+00 : f32
      %91 = vector.broadcast %cst_83 : f32 to vector<8x1xf32>
      %c0_84 = arith.constant 0 : index
      %c0_85 = arith.constant 0 : index
      %92 = vector.load %arg8[%c0_84, %c0_85] : memref<8x1xf32, #tpu.memory_space<vmem>>, vector<8x1xf32>
      tpu.vector_store %arg8[%c0_84, %c0_85], %91 {strides = array<i32>} : memref<8x1xf32, #tpu.memory_space<vmem>>, vector<8x1xf32>,
      %cst_86 = arith.constant 0.000000e+00 : f32
      %93 = vector.broadcast %cst_86 : f32 to vector<8x1xf32>
      %c0_87 = arith.constant 0 : index
      %c0_88 = arith.constant 0 : index
      %94 = vector.load %arg9[%c0_87, %c0_88] : memref<8x1xf32, #tpu.memory_space<vmem>>, vector<8x1xf32>
      tpu.vector_store %arg9[%c0_87, %c0_88], %93 {strides = array<i32>} : memref<8x1xf32, #tpu.memory_space<vmem>>, vector<8x1xf32>,
    } else {
    }
    %cst = arith.constant 0.000000e+00 : f32
    %3 = vector.broadcast %cst : f32 to vector<4x35xf32>
    %c0 = arith.constant 0 : index
    %c0_1 = arith.constant 0 : index
    %c0_2 = arith.constant 0 : index
    %4 = vector.load %arg1[%c0, %c0_1, %c0_2] : memref<1x4x45xf32, #tpu.memory_space<vmem>>, vector<1x4x35xf32>
    %5 = vector.shape_cast %4 : vector<1x4x35xf32> to vector<4x35xf32>
    %c0_3 = arith.constant 0 : index
    %c0_4 = arith.constant 0 : index
    %c0_5 = arith.constant 0 : index
    %6 = vector.load %arg5[%c0_3, %c0_4, %c0_5] : memref<9x4x4xf32, #tpu.memory_space<vmem>>, vector<1x4x4xf32>
    %7 = vector.shape_cast %6 : vector<1x4x4xf32> to vector<4x4xf32>
    %cst_6 = arith.constant dense<0.000000e+00> : vector<4x35xf32>
    %8 = tpu.matmul %7, %5, %cst_6 {dimension_numbers = #tpu.dot_dimension_numbers<[1], [0], [0], [1], [0, 0, 1, 1], [], []>} : vector<4x4xf32>, vector<4x35xf32>, vector<4x35xf32> -> vector<4x35xf32>
    %9 = arith.addf %3, %8 : vector<4x35xf32>
    %c0_7 = arith.constant 0 : index
    %c0_8 = arith.constant 0 : index
    %c0_9 = arith.constant 0 : index
    %10 = vector.load %arg2[%c0_7, %c0_8, %c0_9] : memref<1x4x45xf32, #tpu.memory_space<vmem>>, vector<1x4x35xf32>
    %11 = vector.shape_cast %10 : vector<1x4x35xf32> to vector<4x35xf32>
    %c1 = arith.constant 1 : index
    %c0_10 = arith.constant 0 : index
    %c0_11 = arith.constant 0 : index
    %12 = vector.load %arg5[%c1, %c0_10, %c0_11] : memref<9x4x4xf32, #tpu.memory_space<vmem>>, vector<1x4x4xf32>
    %13 = vector.shape_cast %12 : vector<1x4x4xf32> to vector<4x4xf32>
    %cst_12 = arith.constant dense<0.000000e+00> : vector<4x35xf32>
    %14 = tpu.matmul %13, %11, %cst_12 {dimension_numbers = #tpu.dot_dimension_numbers<[1], [0], [0], [1], [0, 0, 1, 1], [], []>} : vector<4x4xf32>, vector<4x35xf32>, vector<4x35xf32> -> vector<4x35xf32>
    %15 = arith.addf %9, %14 : vector<4x35xf32>
    %c0_13 = arith.constant 0 : index
    %c0_14 = arith.constant 0 : index
    %c1_15 = arith.constant 1 : index
    %16 = vector.load %arg1[%c0_13, %c0_14, %c1_15] : memref<1x4x45xf32, #tpu.memory_space<vmem>>, vector<1x4x35xf32>
    %17 = vector.shape_cast %16 : vector<1x4x35xf32> to vector<4x35xf32>
    %c2 = arith.constant 2 : index
    %c0_16 = arith.constant 0 : index
    %c0_17 = arith.constant 0 : index
    %18 = vector.load %arg5[%c2, %c0_16, %c0_17] : memref<9x4x4xf32, #tpu.memory_space<vmem>>, vector<1x4x4xf32>
    %19 = vector.shape_cast %18 : vector<1x4x4xf32> to vector<4x4xf32>
    %cst_18 = arith.constant dense<0.000000e+00> : vector<4x35xf32>
    %20 = tpu.matmul %19, %17, %cst_18 {dimension_numbers = #tpu.dot_dimension_numbers<[1], [0], [0], [1], [0, 0, 1, 1], [], []>} : vector<4x4xf32>, vector<4x35xf32>, vector<4x35xf32> -> vector<4x35xf32>
    %21 = arith.addf %15, %20 : vector<4x35xf32>
    %c0_19 = arith.constant 0 : index
    %c0_20 = arith.constant 0 : index
    %c0_21 = arith.constant 0 : index
    %22 = vector.load %arg3[%c0_19, %c0_20, %c0_21] : memref<1x4x45xf32, #tpu.memory_space<vmem>>, vector<1x4x35xf32>
    %23 = vector.shape_cast %22 : vector<1x4x35xf32> to vector<4x35xf32>
    %c3 = arith.constant 3 : index
    %c0_22 = arith.constant 0 : index
    %c0_23 = arith.constant 0 : index
    %24 = vector.load %arg5[%c3, %c0_22, %c0_23] : memref<9x4x4xf32, #tpu.memory_space<vmem>>, vector<1x4x4xf32>
    %25 = vector.shape_cast %24 : vector<1x4x4xf32> to vector<4x4xf32>
    %cst_24 = arith.constant dense<0.000000e+00> : vector<4x35xf32>
    %26 = tpu.matmul %25, %23, %cst_24 {dimension_numbers = #tpu.dot_dimension_numbers<[1], [0], [0], [1], [0, 0, 1, 1], [], []>} : vector<4x4xf32>, vector<4x35xf32>, vector<4x35xf32> -> vector<4x35xf32>
    %27 = arith.addf %21, %26 : vector<4x35xf32>
    %c0_25 = arith.constant 0 : index
    %c0_26 = arith.constant 0 : index
    %c0_27 = arith.constant 0 : index
    %28 = vector.load %arg4[%c0_25, %c0_26, %c0_27] : memref<1x4x45xf32, #tpu.memory_space<vmem>>, vector<1x4x35xf32>
    %29 = vector.shape_cast %28 : vector<1x4x35xf32> to vector<4x35xf32>
    %c4 = arith.constant 4 : index
    %c0_28 = arith.constant 0 : index
    %c0_29 = arith.constant 0 : index
    %30 = vector.load %arg5[%c4, %c0_28, %c0_29] : memref<9x4x4xf32, #tpu.memory_space<vmem>>, vector<1x4x4xf32>
    %31 = vector.shape_cast %30 : vector<1x4x4xf32> to vector<4x4xf32>
    %cst_30 = arith.constant dense<0.000000e+00> : vector<4x35xf32>
    %32 = tpu.matmul %31, %29, %cst_30 {dimension_numbers = #tpu.dot_dimension_numbers<[1], [0], [0], [1], [0, 0, 1, 1], [], []>} : vector<4x4xf32>, vector<4x35xf32>, vector<4x35xf32> -> vector<4x35xf32>
    %33 = arith.addf %27, %32 : vector<4x35xf32>
    %c0_31 = arith.constant 0 : index
    %c0_32 = arith.constant 0 : index
    %c1_33 = arith.constant 1 : index
    %34 = vector.load %arg3[%c0_31, %c0_32, %c1_33] : memref<1x4x45xf32, #tpu.memory_space<vmem>>, vector<1x4x35xf32>
    %35 = vector.shape_cast %34 : vector<1x4x35xf32> to vector<4x35xf32>
    %c5 = arith.constant 5 : index
    %c0_34 = arith.constant 0 : index
    %c0_35 = arith.constant 0 : index
    %36 = vector.load %arg5[%c5, %c0_34, %c0_35] : memref<9x4x4xf32, #tpu.memory_space<vmem>>, vector<1x4x4xf32>
    %37 = vector.shape_cast %36 : vector<1x4x4xf32> to vector<4x4xf32>
    %cst_36 = arith.constant dense<0.000000e+00> : vector<4x35xf32>
    %38 = tpu.matmul %37, %35, %cst_36 {dimension_numbers = #tpu.dot_dimension_numbers<[1], [0], [0], [1], [0, 0, 1, 1], [], []>} : vector<4x4xf32>, vector<4x35xf32>, vector<4x35xf32> -> vector<4x35xf32>
    %39 = arith.addf %33, %38 : vector<4x35xf32>
    %c0_37 = arith.constant 0 : index
    %c0_38 = arith.constant 0 : index
    %c9 = arith.constant 9 : index
    %40 = vector.load %arg1[%c0_37, %c0_38, %c9] : memref<1x4x45xf32, #tpu.memory_space<vmem>>, vector<1x4x35xf32>
    %41 = vector.shape_cast %40 : vector<1x4x35xf32> to vector<4x35xf32>
    %c6 = arith.constant 6 : index
    %c0_39 = arith.constant 0 : index
    %c0_40 = arith.constant 0 : index
    %42 = vector.load %arg5[%c6, %c0_39, %c0_40] : memref<9x4x4xf32, #tpu.memory_space<vmem>>, vector<1x4x4xf32>
    %43 = vector.shape_cast %42 : vector<1x4x4xf32> to vector<4x4xf32>
    %cst_41 = arith.constant dense<0.000000e+00> : vector<4x35xf32>
    %44 = tpu.matmul %43, %41, %cst_41 {dimension_numbers = #tpu.dot_dimension_numbers<[1], [0], [0], [1], [0, 0, 1, 1], [], []>} : vector<4x4xf32>, vector<4x35xf32>, vector<4x35xf32> -> vector<4x35xf32>
    %45 = arith.addf %39, %44 : vector<4x35xf32>
    %c0_42 = arith.constant 0 : index
    %c0_43 = arith.constant 0 : index
    %c9_44 = arith.constant 9 : index
    %46 = vector.load %arg2[%c0_42, %c0_43, %c9_44] : memref<1x4x45xf32, #tpu.memory_space<vmem>>, vector<1x4x35xf32>
    %47 = vector.shape_cast %46 : vector<1x4x35xf32> to vector<4x35xf32>
    %c7 = arith.constant 7 : index
    %c0_45 = arith.constant 0 : index
    %c0_46 = arith.constant 0 : index
    %48 = vector.load %arg5[%c7, %c0_45, %c0_46] : memref<9x4x4xf32, #tpu.memory_space<vmem>>, vector<1x4x4xf32>
    %49 = vector.shape_cast %48 : vector<1x4x4xf32> to vector<4x4xf32>
    %cst_47 = arith.constant dense<0.000000e+00> : vector<4x35xf32>
    %50 = tpu.matmul %49, %47, %cst_47 {dimension_numbers = #tpu.dot_dimension_numbers<[1], [0], [0], [1], [0, 0, 1, 1], [], []>} : vector<4x4xf32>, vector<4x35xf32>, vector<4x35xf32> -> vector<4x35xf32>
    %51 = arith.addf %45, %50 : vector<4x35xf32>
    %c0_48 = arith.constant 0 : index
    %c0_49 = arith.constant 0 : index
    %c10 = arith.constant 10 : index
    %52 = vector.load %arg1[%c0_48, %c0_49, %c10] : memref<1x4x45xf32, #tpu.memory_space<vmem>>, vector<1x4x35xf32>
    %53 = vector.shape_cast %52 : vector<1x4x35xf32> to vector<4x35xf32>
    %c8 = arith.constant 8 : index
    %c0_50 = arith.constant 0 : index
    %c0_51 = arith.constant 0 : index
    %54 = vector.load %arg5[%c8, %c0_50, %c0_51] : memref<9x4x4xf32, #tpu.memory_space<vmem>>, vector<1x4x4xf32>
    %55 = vector.shape_cast %54 : vector<1x4x4xf32> to vector<4x4xf32>
    %cst_52 = arith.constant dense<0.000000e+00> : vector<4x35xf32>
    %56 = tpu.matmul %55, %53, %cst_52 {dimension_numbers = #tpu.dot_dimension_numbers<[1], [0], [0], [1], [0, 0, 1, 1], [], []>} : vector<4x4xf32>, vector<4x35xf32>, vector<4x35xf32> -> vector<4x35xf32>
    %57 = arith.addf %51, %56 : vector<4x35xf32>
    %c0_53 = arith.constant 0 : index
    %c0_54 = arith.constant 0 : index
    %c0_55 = arith.constant 0 : index
    %58 = vector.load %arg4[%c0_53, %c0_54, %c0_55] : memref<1x4x45xf32, #tpu.memory_space<vmem>>, vector<1x4x35xf32>
    %59 = vector.shape_cast %58 : vector<1x4x35xf32> to vector<4x35xf32>
    %c0_56 = arith.constant 0 : index
    %c0_57 = arith.constant 0 : index
    %c1_58 = arith.constant 1 : index
    %60 = vector.load %arg3[%c0_56, %c0_57, %c1_58] : memref<1x4x45xf32, #tpu.memory_space<vmem>>, vector<1x4x35xf32>
    %61 = vector.shape_cast %60 : vector<1x4x35xf32> to vector<4x35xf32>
    %c0_59 = arith.constant 0 : index
    %c0_60 = arith.constant 0 : index
    %c9_61 = arith.constant 9 : index
    %62 = vector.load %arg2[%c0_59, %c0_60, %c9_61] : memref<1x4x45xf32, #tpu.memory_space<vmem>>, vector<1x4x35xf32>
    %63 = vector.shape_cast %62 : vector<1x4x35xf32> to vector<4x35xf32>
    %c0_62 = arith.constant 0 : index
    %c0_63 = arith.constant 0 : index
    %c10_64 = arith.constant 10 : index
    %64 = vector.load %arg1[%c0_62, %c0_63, %c10_64] : memref<1x4x45xf32, #tpu.memory_space<vmem>>, vector<1x4x35xf32>
    %65 = vector.shape_cast %64 : vector<1x4x35xf32> to vector<4x35xf32>
    %66 = arith.maximumf %59, %61 : vector<4x35xf32>
    %67 = arith.maximumf %63, %65 : vector<4x35xf32>
    %68 = arith.maximumf %66, %67 : vector<4x35xf32>
    %69 = tpu.concatenate %57, %68 in 0 : vector<4x35xf32>, vector<4x35xf32> -> vector<8x35xf32>
    %c0_65 = arith.constant 0 : index
    %c0_66 = arith.constant 0 : index
    %70 = vector.load %arg6[%c0_65, %c0_66] : memref<1x45xf32, #tpu.memory_space<vmem>>, vector<1x35xf32>
    %71 = vector.broadcast %70 : vector<1x35xf32> to vector<8x35xf32>
    %72 = arith.mulf %69, %71 : vector<8x35xf32>
    %c0_67 = arith.constant 0 : index
    %c0_68 = arith.constant 0 : index
    %c0_69 = arith.constant 0 : index
    %73 = vector.load %arg7[%c0_67, %c0_68, %c0_69] : memref<1x8x45xf32, #tpu.memory_space<vmem>>, vector<1x8x35xf32>
    %74 = vector.shape_cast %73 : vector<1x8x35xf32> to vector<8x35xf32>
    %75 = vector.shape_cast %72 : vector<8x35xf32> to vector<1x8x35xf32>
    tpu.vector_store %arg7[%c0_67, %c0_68, %c0_69], %75 {strides = array<i32>} : memref<1x8x45xf32, #tpu.memory_space<vmem>>, vector<1x8x35xf32>,
    %cst_70 = arith.constant 0.000000e+00 : f32
    %76 = vector.broadcast %cst_70 : f32 to vector<8x10xf32>
    %c0_71 = arith.constant 0 : index
    %c0_72 = arith.constant 0 : index
    %c35 = arith.constant 35 : index
    %77 = vector.load %arg7[%c0_71, %c0_72, %c35] : memref<1x8x45xf32, #tpu.memory_space<vmem>>, vector<1x8x10xf32>
    %78 = vector.shape_cast %77 : vector<1x8x10xf32> to vector<8x10xf32>
    %79 = vector.shape_cast %76 : vector<8x10xf32> to vector<1x8x10xf32>
    tpu.vector_store %arg7[%c0_71, %c0_72, %c35], %79 {strides = array<i32>} : memref<1x8x45xf32, #tpu.memory_space<vmem>>, vector<1x8x10xf32>,
    %c0_73 = arith.constant 0 : index
    %c0_74 = arith.constant 0 : index
    %80 = vector.load %arg8[%c0_73, %c0_74] : memref<8x1xf32, #tpu.memory_space<vmem>>, vector<8x1xf32>
    %cst_75 = arith.constant dense<0.000000e+00> : vector<8xf32>
    %81 = vector.multi_reduction <add>, %72, %cst_75 [1] : vector<8x35xf32> to vector<8xf32>
    %82 = vector.shape_cast %81 : vector<8xf32> to vector<8x1xf32>
    %83 = arith.addf %80, %82 : vector<8x1xf32>
    %c0_76 = arith.constant 0 : index
    %c0_77 = arith.constant 0 : index
    %84 = vector.load %arg8[%c0_76, %c0_77] : memref<8x1xf32, #tpu.memory_space<vmem>>, vector<8x1xf32>
    tpu.vector_store %arg8[%c0_76, %c0_77], %83 {strides = array<i32>} : memref<8x1xf32, #tpu.memory_space<vmem>>, vector<8x1xf32>,
    %c0_78 = arith.constant 0 : index
    %c0_79 = arith.constant 0 : index
    %85 = vector.load %arg9[%c0_78, %c0_79] : memref<8x1xf32, #tpu.memory_space<vmem>>, vector<8x1xf32>
    %86 = arith.mulf %72, %72 : vector<8x35xf32>
    %cst_80 = arith.constant dense<0.000000e+00> : vector<8xf32>
    %87 = vector.multi_reduction <add>, %86, %cst_80 [1] : vector<8x35xf32> to vector<8xf32>
    %88 = vector.shape_cast %87 : vector<8xf32> to vector<8x1xf32>
    %89 = arith.addf %85, %88 : vector<8x1xf32>
    %c0_81 = arith.constant 0 : index
    %c0_82 = arith.constant 0 : index
    %90 = vector.load %arg9[%c0_81, %c0_82] : memref<8x1xf32, #tpu.memory_space<vmem>>, vector<8x1xf32>
    tpu.vector_store %arg9[%c0_81, %c0_82], %89 {strides = array<i32>} : memref<8x1xf32, #tpu.memory_space<vmem>>, vector<8x1xf32>,
    return
  }
  func.func @transform_0(%arg0: i32) -> (i32, i32, i32) {
    %c0_i32 = arith.constant 0 : i32
    %c0_i32_0 = arith.constant 0 : i32
    %c0_i32_1 = arith.constant 0 : i32
    return %arg0, %c0_i32, %c0_i32_0 : i32, i32, i32
  }
  func.func @transform_1(%arg0: i32) -> (i32, i32, i32) {
    %c0_i32 = arith.constant 0 : i32
    %c0_i32_0 = arith.constant 0 : i32
    %c0_i32_1 = arith.constant 0 : i32
    return %arg0, %c0_i32, %c0_i32_0 : i32, i32, i32
  }
  func.func @transform_2(%arg0: i32) -> (i32, i32, i32) {
    %c0_i32 = arith.constant 0 : i32
    %c0_i32_0 = arith.constant 0 : i32
    %c0_i32_1 = arith.constant 0 : i32
    return %arg0, %c0_i32, %c0_i32_0 : i32, i32, i32
  }
  func.func @transform_3(%arg0: i32) -> (i32, i32, i32) {
    %c0_i32 = arith.constant 0 : i32
    %c0_i32_0 = arith.constant 0 : i32
    %c0_i32_1 = arith.constant 0 : i32
    return %arg0, %c0_i32, %c0_i32_0 : i32, i32, i32
  }
  func.func @transform_4(%arg0: i32) -> (i32, i32, i32) {
    %c0_i32 = arith.constant 0 : i32
    %c0_i32_0 = arith.constant 0 : i32
    %c0_i32_1 = arith.constant 0 : i32
    %c0_i32_2 = arith.constant 0 : i32
    return %c0_i32, %c0_i32_0, %c0_i32_1 : i32, i32, i32
  }
  func.func @transform_5(%arg0: i32) -> (i32, i32) {
    %c0_i32 = arith.constant 0 : i32
    %c0_i32_0 = arith.constant 0 : i32
    %c0_i32_1 = arith.constant 0 : i32
    return %c0_i32, %c0_i32_0 : i32, i32
  }
  func.func @transform_6(%arg0: i32) -> (i32, i32, i32) {
    %c0_i32 = arith.constant 0 : i32
    %c0_i32_0 = arith.constant 0 : i32
    %c0_i32_1 = arith.constant 0 : i32
    return %arg0, %c0_i32, %c0_i32_0 : i32, i32, i32
  }
  func.func @transform_7(%arg0: i32) -> (i32, i32) {
    %c0_i32 = arith.constant 0 : i32
    %c0_i32_0 = arith.constant 0 : i32
    %c0_i32_1 = arith.constant 0 : i32
    return %c0_i32, %c0_i32_0 : i32, i32
  }
  func.func @transform_8(%arg0: i32) -> (i32, i32) {
    %c0_i32 = arith.constant 0 : i32
    %c0_i32_0 = arith.constant 0 : i32
    %c0_i32_1 = arith.constant 0 : i32
    return %c0_i32, %c0_i32_0 : i32, i32
  }
}

module attributes {stable_mosaic.version = 11 : i64} {
  func.func @_bn_relu_kernel(%arg0: i32, %arg1: memref<1x8x45xf32, #tpu.memory_space<vmem>>, %arg2: memref<8x1xf32, #tpu.memory_space<vmem>>, %arg3: memref<8x1xf32, #tpu.memory_space<vmem>>, %arg4: memref<8x1xf32, #tpu.memory_space<vmem>>, %arg5: memref<8x1xf32, #tpu.memory_space<vmem>>, %arg6: memref<1x8x45xf32, #tpu.memory_space<vmem>>) attributes {dimension_semantics = [#tpu.dimension_semantics<parallel>], iteration_bounds = array<i64: 4>, scalar_prefetch = 0 : i64, scratch_operands = 0 : i64, tpu.core_type = #tpu.core_type<tc>, window_params = [{transform_indices = @transform_0, window_bounds = array<i64: 1, 8, 45>}, {pipeline_mode = #tpu.pipeline_mode<synchronous>, transform_indices = @transform_1, window_bounds = array<i64: 8, 1>}, {pipeline_mode = #tpu.pipeline_mode<synchronous>, transform_indices = @transform_2, window_bounds = array<i64: 8, 1>}, {pipeline_mode = #tpu.pipeline_mode<synchronous>, transform_indices = @transform_3, window_bounds = array<i64: 8, 1>}, {pipeline_mode = #tpu.pipeline_mode<synchronous>, transform_indices = @transform_4, window_bounds = array<i64: 8, 1>}, {transform_indices = @transform_5, window_bounds = array<i64: 1, 8, 45>}]} {
    %c0 = arith.constant 0 : index
    %c0_0 = arith.constant 0 : index
    %0 = vector.load %arg2[%c0, %c0_0] : memref<8x1xf32, #tpu.memory_space<vmem>>, vector<8x1xf32>
    %cst = arith.constant 7.812500e-03 : f32
    %1 = vector.broadcast %cst : f32 to vector<8x1xf32>
    %2 = arith.mulf %0, %1 : vector<8x1xf32>
    %c0_1 = arith.constant 0 : index
    %c0_2 = arith.constant 0 : index
    %3 = vector.load %arg3[%c0_1, %c0_2] : memref<8x1xf32, #tpu.memory_space<vmem>>, vector<8x1xf32>
    %cst_3 = arith.constant 7.812500e-03 : f32
    %4 = vector.broadcast %cst_3 : f32 to vector<8x1xf32>
    %5 = arith.mulf %3, %4 : vector<8x1xf32>
    %6 = arith.mulf %2, %2 : vector<8x1xf32>
    %7 = arith.subf %5, %6 : vector<8x1xf32>
    %c0_4 = arith.constant 0 : index
    %c0_5 = arith.constant 0 : index
    %8 = vector.load %arg4[%c0_4, %c0_5] : memref<8x1xf32, #tpu.memory_space<vmem>>, vector<8x1xf32>
    %cst_6 = arith.constant 1.000000e-03 : f32
    %9 = vector.broadcast %cst_6 : f32 to vector<8x1xf32>
    %10 = arith.addf %7, %9 : vector<8x1xf32>
    %11 = math.rsqrt %10 : vector<8x1xf32>
    %12 = arith.mulf %8, %11 : vector<8x1xf32>
    %c0_7 = arith.constant 0 : index
    %c0_8 = arith.constant 0 : index
    %13 = vector.load %arg5[%c0_7, %c0_8] : memref<8x1xf32, #tpu.memory_space<vmem>>, vector<8x1xf32>
    %14 = arith.mulf %2, %12 : vector<8x1xf32>
    %15 = arith.subf %13, %14 : vector<8x1xf32>
    %c0_9 = arith.constant 0 : index
    %c0_10 = arith.constant 0 : index
    %c0_11 = arith.constant 0 : index
    %16 = vector.load %arg1[%c0_9, %c0_10, %c0_11] : memref<1x8x45xf32, #tpu.memory_space<vmem>>, vector<1x8x45xf32>
    %17 = vector.shape_cast %16 : vector<1x8x45xf32> to vector<8x45xf32>
    %18 = vector.broadcast %12 : vector<8x1xf32> to vector<8x45xf32>
    %19 = arith.mulf %17, %18 : vector<8x45xf32>
    %20 = vector.broadcast %15 : vector<8x1xf32> to vector<8x45xf32>
    %21 = arith.addf %19, %20 : vector<8x45xf32>
    %cst_12 = arith.constant 0.000000e+00 : f32
    %22 = vector.broadcast %cst_12 : f32 to vector<8x45xf32>
    %23 = arith.maximumf %21, %22 : vector<8x45xf32>
    %c0_13 = arith.constant 0 : index
    %c0_14 = arith.constant 0 : index
    %c0_15 = arith.constant 0 : index
    %24 = vector.load %arg6[%c0_13, %c0_14, %c0_15] : memref<1x8x45xf32, #tpu.memory_space<vmem>>, vector<1x8x45xf32>
    %25 = vector.shape_cast %24 : vector<1x8x45xf32> to vector<8x45xf32>
    %26 = vector.shape_cast %23 : vector<8x45xf32> to vector<1x8x45xf32>
    tpu.vector_store %arg6[%c0_13, %c0_14, %c0_15], %26 {strides = array<i32>} : memref<1x8x45xf32, #tpu.memory_space<vmem>>, vector<1x8x45xf32>,
    return
  }
  func.func @transform_0(%arg0: i32) -> (i32, i32, i32) {
    %c0_i32 = arith.constant 0 : i32
    %c0_i32_0 = arith.constant 0 : i32
    %c0_i32_1 = arith.constant 0 : i32
    return %arg0, %c0_i32, %c0_i32_0 : i32, i32, i32
  }
  func.func @transform_1(%arg0: i32) -> (i32, i32) {
    %c0_i32 = arith.constant 0 : i32
    %c0_i32_0 = arith.constant 0 : i32
    %c0_i32_1 = arith.constant 0 : i32
    return %c0_i32, %c0_i32_0 : i32, i32
  }
  func.func @transform_2(%arg0: i32) -> (i32, i32) {
    %c0_i32 = arith.constant 0 : i32
    %c0_i32_0 = arith.constant 0 : i32
    %c0_i32_1 = arith.constant 0 : i32
    return %c0_i32, %c0_i32_0 : i32, i32
  }
  func.func @transform_3(%arg0: i32) -> (i32, i32) {
    %c0_i32 = arith.constant 0 : i32
    %c0_i32_0 = arith.constant 0 : i32
    %c0_i32_1 = arith.constant 0 : i32
    return %c0_i32, %c0_i32_0 : i32, i32
  }
  func.func @transform_4(%arg0: i32) -> (i32, i32) {
    %c0_i32 = arith.constant 0 : i32
    %c0_i32_0 = arith.constant 0 : i32
    %c0_i32_1 = arith.constant 0 : i32
    return %c0_i32, %c0_i32_0 : i32, i32
  }
  func.func @transform_5(%arg0: i32) -> (i32, i32, i32) {
    %c0_i32 = arith.constant 0 : i32
    %c0_i32_0 = arith.constant 0 : i32
    %c0_i32_1 = arith.constant 0 : i32
    return %arg0, %c0_i32, %c0_i32_0 : i32, i32, i32
  }
}

</mosaic_0001>

<llo_original>
// kernel: downsampler_block.3
$region0: #{downsampler_block.3}
  #allocation0 [shape = 'u32[]', space=smem, size = 0x4, offset = 0x4, fixed_abs, tag = 'smem constant byte address 0x4 - core index']
  #allocation1 [shape = 'u32[144,128]{1,0:T(1,128)}', space=vmem, size = 0x12000, scoped, tag = 'internal scratch']
  %s0 = inlined_call_operand.vmem [shape: f32[4,8,45], index: 0, kind: input, shape index: {}]
  %s1 = inlined_call_operand.vmem [shape: f32[8,1], index: 1, kind: input, shape index: {}]
  %s2 = inlined_call_operand.vmem [shape: f32[8,1], index: 2, kind: input, shape index: {}]
  %s3 = inlined_call_operand.vmem [shape: f32[8,1], index: 3, kind: input, shape index: {}]
  %s4 = inlined_call_operand.vmem [shape: f32[8,1], index: 4, kind: input, shape index: {}]
  %s5 = inlined_call_operand.vmem [shape: f32[4,8,45], index: 5, kind: output, shape index: {}]
  %s6 = sld [smem:[#allocation0]]
  $region53: #{downsampler_block.3} parent=0
    _
  %s8 = ssub.s32 1, %s6
  %s9 = scalar_select 0, %s8, %s6
  loop: start=0, step=1, limit=6
  $region2: #{downsampler_block.3} parent=0 // loop_pre_header
    _
  $region3: #{downsampler_block.3} parent=0 // loop_header
    %s11 = sphi 0, %s15
    %p12 = scmp.ge.s32.totalorder %s11, 6
    %s21 = sphi 0, %s23
    %s24 = sphi 0, %s21
    %s25 = sphi 0, %s24
    %s41 = sphi 0, %s25
    %s45 = sphi 0, %s45
    %s47 = sphi 0, %s45
    %s48 = sphi 0, %s47
    %s62 = sphi 0, %s48
    %s66 = sphi 0, %s66
    %s68 = sphi 0, %s66
    %s69 = sphi 0, %s68
    %s83 = sphi 0, %s69
    %s87 = sphi 0, %s87
    %s89 = sphi 0, %s87
    %s90 = sphi 0, %s89
    %s104 = sphi 0, %s90
    %s108 = sphi 0, %s108
    %s110 = sphi 0, %s108
    %s111 = sphi 0, %s110
    %s125 = sphi 0, %s111
    %s131 = sphi 0, %s133
    %s134 = sphi 0, %s131
    %s135 = sphi 0, %s134
    %s151 = sphi 0, %s135
  $region4: #{downsampler_block.3} parent=0 // loop_header_branch
    %14 = sbr.rel (%p12) target = $region8
  $region5: #{downsampler_block.3} parent=0 // loop_body
    %s16 = ssub.s32 %s11, 1
    %s17 = ssub.s32 %s11, 2
    %s18 = sadd.s32 %s11, 1
    %s19 = ssub.s32 %s11, %s18
    %p20 = scmp.eq.s32.totalorder %s19, 0
    %s22 = sadd.s32 %s21, 1
    %s23 = scalar_select %p20, %s21, %s22
    %p26 = pneg %p20
    %p27 = scmp.eq.s32.totalorder %s11, 3
    %p28 = por %p26, %p27
    %p29 = scmp.ne.s32.totalorder %s21, %s24
    %p30 = scmp.eq.s32.totalorder %s11, 0
    %p31 = por %p29, %p30
    %p32 = scmp.ne.s32.totalorder %s21, %s24
    %p33 = scmp.eq.s32.totalorder %s16, 3
    %p34 = por %p32, %p33
    %p35 = scmp.ne.s32.totalorder %s24, %s25
    %p36 = scmp.eq.s32.totalorder %s16, 0
    %p37 = por %p35, %p36
    %p38 = scmp.ne.s32.totalorder %s24, %s25
    %p39 = scmp.eq.s32.totalorder %s17, 3
    %p40 = por %p38, %p39
    %p42 = scmp.ne.s32.totalorder %s25, %s41
    %p43 = scmp.eq.s32.totalorder %s17, 0
    %p44 = por %p42, %p43
    %s46 = sadd.s32 %s45, 1
    %p49 = scmp.eq.s32.totalorder %s11, 3
    %p50 = scmp.ne.s32.totalorder %s45, %s47
    %p51 = scmp.eq.s32.totalorder %s11, 0
    %p52 = por %p50, %p51
    %p53 = scmp.ne.s32.totalorder %s45, %s47
    %p54 = scmp.eq.s32.totalorder %s16, 3
    %p55 = por %p53, %p54
    %p56 = scmp.ne.s32.totalorder %s47, %s48
    %p57 = scmp.eq.s32.totalorder %s16, 0
    %p58 = por %p56, %p57
    %p59 = scmp.ne.s32.totalorder %s47, %s48
    %p60 = scmp.eq.s32.totalorder %s17, 3
    %p61 = por %p59, %p60
    %p63 = scmp.ne.s32.totalorder %s48, %s62
    %p64 = scmp.eq.s32.totalorder %s17, 0
    %p65 = por %p63, %p64
    %s67 = sadd.s32 %s66, 1
    %p70 = scmp.eq.s32.totalorder %s11, 3
    %p71 = scmp.ne.s32.totalorder %s66, %s68
    %p72 = scmp.eq.s32.totalorder %s11, 0
    %p73 = por %p71, %p72
    %p74 = scmp.ne.s32.totalorder %s66, %s68
    %p75 = scmp.eq.s32.totalorder %s16, 3
    %p76 = por %p74, %p75
    %p77 = scmp.ne.s32.totalorder %s68, %s69
    %p78 = scmp.eq.s32.totalorder %s16, 0
    %p79 = por %p77, %p78
    %p80 = scmp.ne.s32.totalorder %s68, %s69
    %p81 = scmp.eq.s32.totalorder %s17, 3
    %p82 = por %p80, %p81
    %p84 = scmp.ne.s32.totalorder %s69, %s83
    %p85 = scmp.eq.s32.totalorder %s17, 0
    %p86 = por %p84, %p85
    %s88 = sadd.s32 %s87, 1
    %p91 = scmp.eq.s32.totalorder %s11, 3
    %p92 = scmp.ne.s32.totalorder %s87, %s89
    %p93 = scmp.eq.s32.totalorder %s11, 0
    %p94 = por %p92, %p93
    %p95 = scmp.ne.s32.totalorder %s87, %s89
    %p96 = scmp.eq.s32.totalorder %s16, 3
    %p97 = por %p95, %p96
    %p98 = scmp.ne.s32.totalorder %s89, %s90
    %p99 = scmp.eq.s32.totalorder %s16, 0
    %p100 = por %p98, %p99
    %p101 = scmp.ne.s32.totalorder %s89, %s90
    %p102 = scmp.eq.s32.totalorder %s17, 3
    %p103 = por %p101, %p102
    %p105 = scmp.ne.s32.totalorder %s90, %s104
    %p106 = scmp.eq.s32.totalorder %s17, 0
    %p107 = por %p105, %p106
    %s109 = sadd.s32 %s108, 1
    %p112 = scmp.eq.s32.totalorder %s11, 3
    %p113 = scmp.ne.s32.totalorder %s108, %s110
    %p114 = scmp.eq.s32.totalorder %s11, 0
    %p115 = por %p113, %p114
    %p116 = scmp.ne.s32.totalorder %s108, %s110
    %p117 = scmp.eq.s32.totalorder %s16, 3
    %p118 = por %p116, %p117
    %p119 = scmp.ne.s32.totalorder %s110, %s111
    %p120 = scmp.eq.s32.totalorder %s16, 0
    %p121 = por %p119, %p120
    %p122 = scmp.ne.s32.totalorder %s110, %s111
    %p123 = scmp.eq.s32.totalorder %s17, 3
    %p124 = por %p122, %p123
    %p126 = scmp.ne.s32.totalorder %s111, %s125
    %p127 = scmp.eq.s32.totalorder %s17, 0
    %p128 = por %p126, %p127
    %s129 = ssub.s32 %s11, %s18
    %p130 = scmp.eq.s32.totalorder %s129, 0
    %s132 = sadd.s32 %s131, 1
    %s133 = scalar_select %p130, %s131, %s132
    %p136 = pneg %p130
    %p137 = scmp.eq.s32.totalorder %s11, 3
    %p138 = por %p136, %p137
    %p139 = scmp.ne.s32.totalorder %s131, %s134
    %p140 = scmp.eq.s32.totalorder %s11, 0
    %p141 = por %p139, %p140
    %p142 = scmp.ne.s32.totalorder %s131, %s134
    %p143 = scmp.eq.s32.totalorder %s16, 3
    %p144 = por %p142, %p143
    %p145 = scmp.ne.s32.totalorder %s134, %s135
    %p146 = scmp.eq.s32.totalorder %s16, 0
    %p147 = por %p145, %p146
    %p148 = scmp.ne.s32.totalorder %s134, %s135
    %p149 = scmp.eq.s32.totalorder %s17, 3
    %p150 = por %p148, %p149
    %p152 = scmp.ne.s32.totalorder %s135, %s151
    %p153 = scmp.eq.s32.totalorder %s17, 0
    %p154 = por %p152, %p153
    %p155 = scmp.le.s32.totalorder 1, %s11
    %p156 = scmp.lt.s32.totalorder %s11, 5
    %p157 = pnand %p155, %p156
    %p158 = pneg %p157
    // Predicated region
    $region9: #{downsampler_block.3} parent=5 // pred_check
      _
    $region10: #{downsampler_block.3} parent=5 // pred_check_branch
      %160 = sbr.rel (%p157) target = $region12
    $region11: #{downsampler_block.3} parent=5 // pred_region
      %s161 = ssub.s32 %s11, 1
      // Predicated region
      $region13: #{downsampler_block.3} parent=11 // pred_check
        %p162 = pneg %p58
      $region14: #{downsampler_block.3} parent=11 // pred_check_branch
        %164 = sbr.rel (%p162) target = $region16
      $region15: #{downsampler_block.3} parent=11 // pred_region
        _
      $region16: #{downsampler_block.3} parent=11 // pred_fallthru
        _
      // Predicated region
      $region17: #{downsampler_block.3} parent=11 // pred_check
        %p165 = pneg %p79
      $region18: #{downsampler_block.3} parent=11 // pred_check_branch
        %167 = sbr.rel (%p165) target = $region20
      $region19: #{downsampler_block.3} parent=11 // pred_region
        _
      $region20: #{downsampler_block.3} parent=11 // pred_fallthru
        _
      // Predicated region
      $region21: #{downsampler_block.3} parent=11 // pred_check
        %p168 = pneg %p100
      $region22: #{downsampler_block.3} parent=11 // pred_check_branch
        %170 = sbr.rel (%p168) target = $region24
      $region23: #{downsampler_block.3} parent=11 // pred_region
        _
      $region24: #{downsampler_block.3} parent=11 // pred_fallthru
        _
      // Predicated region
      $region25: #{downsampler_block.3} parent=11 // pred_check
        %p171 = pneg %p121
      $region26: #{downsampler_block.3} parent=11 // pred_check_branch
        %173 = sbr.rel (%p171) target = $region28
      $region27: #{downsampler_block.3} parent=11 // pred_region
        _
      $region28: #{downsampler_block.3} parent=11 // pred_fallthru
        _
    $region12: #{downsampler_block.3} parent=5 // pred_fallthru
      _
    %p174 = scmp.lt.s32.totalorder %s11, 4
    // Predicated region
    $region29: #{downsampler_block.3} parent=5 // pred_check
      %p175 = pneg %p174
    $region30: #{downsampler_block.3} parent=5 // pred_check_branch
      %177 = sbr.rel (%p175) target = $region32
    $region31: #{downsampler_block.3} parent=5 // pred_region
      // Predicated region
      $region33: #{downsampler_block.3} parent=31 // pred_check
        %p178 = pneg %p31
      $region34: #{downsampler_block.3} parent=31 // pred_check_branch
        %180 = sbr.rel (%p178) target = $region36
      $region35: #{downsampler_block.3} parent=31 // pred_region
        %p181 = scmp.lt.s32.totalorder %s11, 3
        %s182 = scalar_select %p181, %s11, 3
        %s183 = smul.addr %s182, 8
        %s184 = scalar_lea.vmem %s0, %s183
      $region36: #{downsampler_block.3} parent=31 // pred_fallthru
        _
    $region32: #{downsampler_block.3} parent=5 // pred_fallthru
      _
    %p185 = scmp.le.s32.totalorder 1, %s11
    %p186 = scmp.lt.s32.totalorder %s11, 5
    %p187 = pnand %p185, %p186
    %p188 = pneg %p187
    // Predicated region
    $region37: #{downsampler_block.3} parent=5 // pred_check
      _
    $region38: #{downsampler_block.3} parent=5 // pred_check_branch
      %190 = sbr.rel (%p187) target = $region40
    $region39: #{downsampler_block.3} parent=5 // pred_region
      %s191 = ssub.s32 %s11, 1
      %p192 = scmp.lt.s32.totalorder %s16, 3
      %s193 = scalar_select %p192, %s16, 3
      %s194 = smul.addr %s193, 8
      %s195 = scalar_lea.vmem %s0, %s194
      %p196 = pneg %p37
      %p197 = pneg %p34
      %p198 = pneg %p58
      %p199 = pneg %p55
      %p200 = pneg %p79
      %p201 = pneg %p76
      %p202 = pneg %p100
      %p203 = pneg %p97
      %p204 = pneg %p121
      %p205 = pneg %p118
      %p206 = pneg %p147
      %p207 = pneg %p144
      %p208 = scmp.lt.s32.totalorder %s16, 3
      %s209 = scalar_select %p208, %s16, 3
      %s210 = smul.addr %s209, 8
      %s211 = scalar_lea.vmem %s5, %s210
      %p212 = scmp.lt.s32.totalorder %s16, 3
      %s213 = scalar_select %p212, %s16, 3
      %s214 = smul.addr %s213, 8
      %s215 = scalar_lea.vmem %s0, %s214
      %p216 = scmp.lt.s32.totalorder %s16, 3
      %s217 = scalar_select %p216, %s16, 3
      %s218 = smul.addr %s217, 8
      %s219 = scalar_lea.vmem %s5, %s218
      %v220 = vld [vmem:[%s1] sm:$0xff]
      %v221 = vmul.f32 %v220, 0.0078125
      %v222 = vld [vmem:[%s2] sm:$0xff]
      %v223 = vmul.f32 %v222, 0.0078125
      %v224 = vmul.f32 %v221, %v221
      %v225 = vsub.f32 %v223, %v224
      %v226 = vld [vmem:[%s3] sm:$0xff]
      %v227 = vadd.f32 %v225, 0.001
      %v228 = vrsqrt.pop %v227
      %v229 = vmul.f32 %v226, %v228
      %v230 = vld [vmem:[%s4] sm:$0xff]
      %v231 = vmul.f32 %v221, %v229
      %v232 = vsub.f32 %v230, %v231
      %v233 = vld [vmem:[%s215] sm:$0xff]
      %235 = vset.pattern.permute.xlu0 0
      %236 = vperm.xlu0 %235, %v229
      %v237 = vpop.permute.xlu0 %236
      %v239 = vmul.f32 %v233, %v237
      %241 = vset.pattern.permute.xlu0 0
      %242 = vperm.xlu0 %241, %v232
      %v243 = vpop.permute.xlu0 %242
      %v245 = vadd.f32 %v239, %v243
      %v246 = vmax.f32 %v245, 0.0
      %vm247 = vcmask 367616
      %248 = vst.msk [vmem:[%s219] sm:$0xff] %vm247, %v246
      %p249 = scmp.lt.s32.totalorder %s16, 3
      %s250 = scalar_select %p249, %s16, 3
      %s251 = smul.addr %s250, 8
      %s252 = scalar_lea.vmem %s5, %s251
      // Predicated region
      $region41: #{downsampler_block.3} parent=39 // pred_check
        %p253 = pneg %p144
      $region42: #{downsampler_block.3} parent=39 // pred_check_branch
        %255 = sbr.rel (%p253) target = $region44
      $region43: #{downsampler_block.3} parent=39 // pred_region
        _
      $region44: #{downsampler_block.3} parent=39 // pred_fallthru
        _
    $region40: #{downsampler_block.3} parent=5 // pred_fallthru
      _
    %p256 = scmp.le.s32.totalorder 2, %s11
    // Predicated region
    $region45: #{downsampler_block.3} parent=5 // pred_check
      %p257 = pneg %p256
    $region46: #{downsampler_block.3} parent=5 // pred_check_branch
      %259 = sbr.rel (%p257) target = $region48
    $region47: #{downsampler_block.3} parent=5 // pred_region
      %s260 = ssub.s32 %s11, 2
      // Predicated region
      $region49: #{downsampler_block.3} parent=47 // pred_check
        %p261 = pneg %p150
      $region50: #{downsampler_block.3} parent=47 // pred_check_branch
        %263 = sbr.rel (%p261) target = $region52
      $region51: #{downsampler_block.3} parent=47 // pred_region
        %p264 = scmp.lt.s32.totalorder %s17, 3
        %s265 = scalar_select %p264, %s17, 3
        %s266 = smul.addr %s265, 8
        %s267 = scalar_lea.vmem %s5, %s266
      $region52: #{downsampler_block.3} parent=47 // pred_fallthru
        _
    $region48: #{downsampler_block.3} parent=5 // pred_fallthru
      _
  $region6: #{downsampler_block.3} parent=0 // loop_footer
    %s15 = sadd.s32 1, %s11
  $region7: #{downsampler_block.3} parent=0 // loop_footer_branch
    %10 = sbr.rel target = $region3
  $region8: #{downsampler_block.3} parent=0 // loop_exit
    _

// kernel: downsampler_block.2
$region0: #{downsampler_block.2}
  #allocation0 [shape = 'u32[]', space=smem, size = 0x4, offset = 0x4, fixed_abs, tag = 'smem constant byte address 0x4 - core index']
  #allocation1 [shape = 'u32[144,128]{1,0:T(1,128)}', space=vmem, size = 0x12000, scoped, tag = 'internal scratch']
  %s0 = inlined_call_operand.vmem [shape: f32[4,4,45], index: 0, kind: input, shape index: {}]
  %s1 = inlined_call_operand.vmem [shape: f32[4,4,45], index: 1, kind: input, shape index: {}]
  %s2 = inlined_call_operand.vmem [shape: f32[4,4,45], index: 2, kind: input, shape index: {}]
  %s3 = inlined_call_operand.vmem [shape: f32[4,4,45], index: 3, kind: input, shape index: {}]
  %s4 = inlined_call_operand.vmem [shape: f32[9,4,4], index: 4, kind: input, shape index: {}]
  %s5 = inlined_call_operand.vmem [shape: f32[1,45], index: 5, kind: input, shape index: {}]
  %s6 = inlined_call_operand.vmem [shape: f32[4,8,45], index: 6, kind: output, shape index: {0}]
  %s7 = inlined_call_operand.vmem [shape: f32[8,1], index: 7, kind: output, shape index: {1}]
  %s8 = inlined_call_operand.vmem [shape: f32[8,1], index: 8, kind: output, shape index: {2}]
  %9 = xla_tuple %s6, %s7, %s8
  %s10 = sld [smem:[#allocation0]]
  $region77: #{downsampler_block.2} parent=0
    _
  %s12 = ssub.s32 1, %s10
  %s13 = scalar_select 0, %s12, %s10
  loop: start=0, step=1, limit=6
  $region2: #{downsampler_block.2} parent=0 // loop_pre_header
    _
  $region3: #{downsampler_block.2} parent=0 // loop_header
    %s15 = sphi 0, %s19
    %p16 = scmp.ge.s32.totalorder %s15, 6
    %s25 = sphi 0, %s27
    %s28 = sphi 0, %s25
    %s29 = sphi 0, %s28
    %s45 = sphi 0, %s29
    %s51 = sphi 0, %s53
    %s54 = sphi 0, %s51
    %s55 = sphi 0, %s54
    %s71 = sphi 0, %s55
    %s77 = sphi 0, %s79
    %s80 = sphi 0, %s77
    %s81 = sphi 0, %s80
    %s97 = sphi 0, %s81
    %s103 = sphi 0, %s105
    %s106 = sphi 0, %s103
    %s107 = sphi 0, %s106
    %s123 = sphi 0, %s107
    %s127 = sphi 0, %s127
    %s129 = sphi 0, %s127
    %s130 = sphi 0, %s129
    %s144 = sphi 0, %s130
    %s148 = sphi 0, %s148
    %s150 = sphi 0, %s148
    %s151 = sphi 0, %s150
    %s165 = sphi 0, %s151
    %s171 = sphi 0, %s173
    %s174 = sphi 0, %s171
    %s175 = sphi 0, %s174
    %s191 = sphi 0, %s175
    %s195 = sphi 0, %s195
    %s197 = sphi 0, %s195
    %s198 = sphi 0, %s197
    %s212 = sphi 0, %s198
    %s216 = sphi 0, %s216
    %s218 = sphi 0, %s216
    %s219 = sphi 0, %s218
    %s233 = sphi 0, %s219
  $region4: #{downsampler_block.2} parent=0 // loop_header_branch
    %18 = sbr.rel (%p16) target = $region8
  $region5: #{downsampler_block.2} parent=0 // loop_body
    %s20 = ssub.s32 %s15, 1
    %s21 = ssub.s32 %s15, 2
    %s22 = sadd.s32 %s15, 1
    %s23 = ssub.s32 %s15, %s22
    %p24 = scmp.eq.s32.totalorder %s23, 0
    %s26 = sadd.s32 %s25, 1
    %s27 = scalar_select %p24, %s25, %s26
    %p30 = pneg %p24
    %p31 = scmp.eq.s32.totalorder %s15, 3
    %p32 = por %p30, %p31
    %p33 = scmp.ne.s32.totalorder %s25, %s28
    %p34 = scmp.eq.s32.totalorder %s15, 0
    %p35 = por %p33, %p34
    %p36 = scmp.ne.s32.totalorder %s25, %s28
    %p37 = scmp.eq.s32.totalorder %s20, 3
    %p38 = por %p36, %p37
    %p39 = scmp.ne.s32.totalorder %s28, %s29
    %p40 = scmp.eq.s32.totalorder %s20, 0
    %p41 = por %p39, %p40
    %p42 = scmp.ne.s32.totalorder %s28, %s29
    %p43 = scmp.eq.s32.totalorder %s21, 3
    %p44 = por %p42, %p43
    %p46 = scmp.ne.s32.totalorder %s29, %s45
    %p47 = scmp.eq.s32.totalorder %s21, 0
    %p48 = por %p46, %p47
    %s49 = ssub.s32 %s15, %s22
    %p50 = scmp.eq.s32.totalorder %s49, 0
    %s52 = sadd.s32 %s51, 1
    %s53 = scalar_select %p50, %s51, %s52
    %p56 = pneg %p50
    %p57 = scmp.eq.s32.totalorder %s15, 3
    %p58 = por %p56, %p57
    %p59 = scmp.ne.s32.totalorder %s51, %s54
    %p60 = scmp.eq.s32.totalorder %s15, 0
    %p61 = por %p59, %p60
    %p62 = scmp.ne.s32.totalorder %s51, %s54
    %p63 = scmp.eq.s32.totalorder %s20, 3
    %p64 = por %p62, %p63
    %p65 = scmp.ne.s32.totalorder %s54, %s55
    %p66 = scmp.eq.s32.totalorder %s20, 0
    %p67 = por %p65, %p66
    %p68 = scmp.ne.s32.totalorder %s54, %s55
    %p69 = scmp.eq.s32.totalorder %s21, 3
    %p70 = por %p68, %p69
    %p72 = scmp.ne.s32.totalorder %s55, %s71
    %p73 = scmp.eq.s32.totalorder %s21, 0
    %p74 = por %p72, %p73
    %s75 = ssub.s32 %s15, %s22
    %p76 = scmp.eq.s32.totalorder %s75, 0
    %s78 = sadd.s32 %s77, 1
    %s79 = scalar_select %p76, %s77, %s78
    %p82 = pneg %p76
    %p83 = scmp.eq.s32.totalorder %s15, 3
    %p84 = por %p82, %p83
    %p85 = scmp.ne.s32.totalorder %s77, %s80
    %p86 = scmp.eq.s32.totalorder %s15, 0
    %p87 = por %p85, %p86
    %p88 = scmp.ne.s32.totalorder %s77, %s80
    %p89 = scmp.eq.s32.totalorder %s20, 3
    %p90 = por %p88, %p89
    %p91 = scmp.ne.s32.totalorder %s80, %s81
    %p92 = scmp.eq.s32.totalorder %s20, 0
    %p93 = por %p91, %p92
    %p94 = scmp.ne.s32.totalorder %s80, %s81
    %p95 = scmp.eq.s32.totalorder %s21, 3
    %p96 = por %p94, %p95
    %p98 = scmp.ne.s32.totalorder %s81, %s97
    %p99 = scmp.eq.s32.totalorder %s21, 0
    %p100 = por %p98, %p99
    %s101 = ssub.s32 %s15, %s22
    %p102 = scmp.eq.s32.totalorder %s101, 0
    %s104 = sadd.s32 %s103, 1
    %s105 = scalar_select %p102, %s103, %s104
    %p108 = pneg %p102
    %p109 = scmp.eq.s32.totalorder %s15, 3
    %p110 = por %p108, %p109
    %p111 = scmp.ne.s32.totalorder %s103, %s106
    %p112 = scmp.eq.s32.totalorder %s15, 0
    %p113 = por %p111, %p112
    %p114 = scmp.ne.s32.totalorder %s103, %s106
    %p115 = scmp.eq.s32.totalorder %s20, 3
    %p116 = por %p114, %p115
    %p117 = scmp.ne.s32.totalorder %s106, %s107
    %p118 = scmp.eq.s32.totalorder %s20, 0
    %p119 = por %p117, %p118
    %p120 = scmp.ne.s32.totalorder %s106, %s107
    %p121 = scmp.eq.s32.totalorder %s21, 3
    %p122 = por %p120, %p121
    %p124 = scmp.ne.s32.totalorder %s107, %s123
    %p125 = scmp.eq.s32.totalorder %s21, 0
    %p126 = por %p124, %p125
    %s128 = sadd.s32 %s127, 1
    %p131 = scmp.eq.s32.totalorder %s15, 3
    %p132 = scmp.ne.s32.totalorder %s127, %s129
    %p133 = scmp.eq.s32.totalorder %s15, 0
    %p134 = por %p132, %p133
    %p135 = scmp.ne.s32.totalorder %s127, %s129
    %p136 = scmp.eq.s32.totalorder %s20, 3
    %p137 = por %p135, %p136
    %p138 = scmp.ne.s32.totalorder %s129, %s130
    %p139 = scmp.eq.s32.totalorder %s20, 0
    %p140 = por %p138, %p139
    %p141 = scmp.ne.s32.totalorder %s129, %s130
    %p142 = scmp.eq.s32.totalorder %s21, 3
    %p143 = por %p141, %p142
    %p145 = scmp.ne.s32.totalorder %s130, %s144
    %p146 = scmp.eq.s32.totalorder %s21, 0
    %p147 = por %p145, %p146
    %s149 = sadd.s32 %s148, 1
    %p152 = scmp.eq.s32.totalorder %s15, 3
    %p153 = scmp.ne.s32.totalorder %s148, %s150
    %p154 = scmp.eq.s32.totalorder %s15, 0
    %p155 = por %p153, %p154
    %p156 = scmp.ne.s32.totalorder %s148, %s150
    %p157 = scmp.eq.s32.totalorder %s20, 3
    %p158 = por %p156, %p157
    %p159 = scmp.ne.s32.totalorder %s150, %s151
    %p160 = scmp.eq.s32.totalorder %s20, 0
    %p161 = por %p159, %p160
    %p162 = scmp.ne.s32.totalorder %s150, %s151
    %p163 = scmp.eq.s32.totalorder %s21, 3
    %p164 = por %p162, %p163
    %p166 = scmp.ne.s32.totalorder %s151, %s165
    %p167 = scmp.eq.s32.totalorder %s21, 0
    %p168 = por %p166, %p167
    %s169 = ssub.s32 %s15, %s22
    %p170 = scmp.eq.s32.totalorder %s169, 0
    %s172 = sadd.s32 %s171, 1
    %s173 = scalar_select %p170, %s171, %s172
    %p176 = pneg %p170
    %p177 = scmp.eq.s32.totalorder %s15, 3
    %p178 = por %p176, %p177
    %p179 = scmp.ne.s32.totalorder %s171, %s174
    %p180 = scmp.eq.s32.totalorder %s15, 0
    %p181 = por %p179, %p180
    %p182 = scmp.ne.s32.totalorder %s171, %s174
    %p183 = scmp.eq.s32.totalorder %s20, 3
    %p184 = por %p182, %p183
    %p185 = scmp.ne.s32.totalorder %s174, %s175
    %p186 = scmp.eq.s32.totalorder %s20, 0
    %p187 = por %p185, %p186
    %p188 = scmp.ne.s32.totalorder %s174, %s175
    %p189 = scmp.eq.s32.totalorder %s21, 3
    %p190 = por %p188, %p189
    %p192 = scmp.ne.s32.totalorder %s175, %s191
    %p193 = scmp.eq.s32.totalorder %s21, 0
    %p194 = por %p192, %p193
    %s196 = sadd.s32 %s195, 1
    %p199 = scmp.eq.s32.totalorder %s15, 3
    %p200 = scmp.ne.s32.totalorder %s195, %s197
    %p201 = scmp.eq.s32.totalorder %s15, 0
    %p202 = por %p200, %p201
    %p203 = scmp.ne.s32.totalorder %s195, %s197
    %p204 = scmp.eq.s32.totalorder %s20, 3
    %p205 = por %p203, %p204
    %p206 = scmp.ne.s32.totalorder %s197, %s198
    %p207 = scmp.eq.s32.totalorder %s20, 0
    %p208 = por %p206, %p207
    %p209 = scmp.ne.s32.totalorder %s197, %s198
    %p210 = scmp.eq.s32.totalorder %s21, 3
    %p211 = por %p209, %p210
    %p213 = scmp.ne.s32.totalorder %s198, %s212
    %p214 = scmp.eq.s32.totalorder %s21, 0
    %p215 = por %p213, %p214
    %s217 = sadd.s32 %s216, 1
    %p220 = scmp.eq.s32.totalorder %s15, 3
    %p221 = scmp.ne.s32.totalorder %s216, %s218
    %p222 = scmp.eq.s32.totalorder %s15, 0
    %p223 = por %p221, %p222
    %p224 = scmp.ne.s32.totalorder %s216, %s218
    %p225 = scmp.eq.s32.totalorder %s20, 3
    %p226 = por %p224, %p225
    %p227 = scmp.ne.s32.totalorder %s218, %s219
    %p228 = scmp.eq.s32.totalorder %s20, 0
    %p229 = por %p227, %p228
    %p230 = scmp.ne.s32.totalorder %s218, %s219
    %p231 = scmp.eq.s32.totalorder %s21, 3
    %p232 = por %p230, %p231
    %p234 = scmp.ne.s32.totalorder %s219, %s233
    %p235 = scmp.eq.s32.totalorder %s21, 0
    %p236 = por %p234, %p235
    %p237 = scmp.le.s32.totalorder 1, %s15
    %p238 = scmp.lt.s32.totalorder %s15, 5
    %p239 = pnand %p237, %p238
    %p240 = pneg %p239
    // Predicated region
    $region9: #{downsampler_block.2} parent=5 // pred_check
      _
    $region10: #{downsampler_block.2} parent=5 // pred_check_branch
      %242 = sbr.rel (%p239) target = $region12
    $region11: #{downsampler_block.2} parent=5 // pred_region
      %s243 = ssub.s32 %s15, 1
      // Predicated region
      $region13: #{downsampler_block.2} parent=11 // pred_check
        %p244 = pneg %p140
      $region14: #{downsampler_block.2} parent=11 // pred_check_branch
        %246 = sbr.rel (%p244) target = $region16
      $region15: #{downsampler_block.2} parent=11 // pred_region
        _
      $region16: #{downsampler_block.2} parent=11 // pred_fallthru
        _
      // Predicated region
      $region17: #{downsampler_block.2} parent=11 // pred_check
        %p247 = pneg %p161
      $region18: #{downsampler_block.2} parent=11 // pred_check_branch
        %249 = sbr.rel (%p247) target = $region20
      $region19: #{downsampler_block.2} parent=11 // pred_region
        _
      $region20: #{downsampler_block.2} parent=11 // pred_fallthru
        _
    $region12: #{downsampler_block.2} parent=5 // pred_fallthru
      _
    %p250 = scmp.lt.s32.totalorder %s15, 4
    // Predicated region
    $region21: #{downsampler_block.2} parent=5 // pred_check
      %p251 = pneg %p250
    $region22: #{downsampler_block.2} parent=5 // pred_check_branch
      %253 = sbr.rel (%p251) target = $region24
    $region23: #{downsampler_block.2} parent=5 // pred_region
      // Predicated region
      $region25: #{downsampler_block.2} parent=23 // pred_check
        %p254 = pneg %p35
      $region26: #{downsampler_block.2} parent=23 // pred_check_branch
        %256 = sbr.rel (%p254) target = $region28
      $region27: #{downsampler_block.2} parent=23 // pred_region
        %p257 = scmp.lt.s32.totalorder %s15, 3
        %s258 = scalar_select %p257, %s15, 3
        %s259 = smul.addr %s258, 4
        %s260 = scalar_lea.vmem %s0, %s259
      $region28: #{downsampler_block.2} parent=23 // pred_fallthru
        _
      // Predicated region
      $region29: #{downsampler_block.2} parent=23 // pred_check
        %p261 = pneg %p61
      $region30: #{downsampler_block.2} parent=23 // pred_check_branch
        %263 = sbr.rel (%p261) target = $region32
      $region31: #{downsampler_block.2} parent=23 // pred_region
        %p264 = scmp.lt.s32.totalorder %s15, 3
        %s265 = scalar_select %p264, %s15, 3
        %s266 = smul.addr %s265, 4
        %s267 = scalar_lea.vmem %s1, %s266
      $region32: #{downsampler_block.2} parent=23 // pred_fallthru
        _
      // Predicated region
      $region33: #{downsampler_block.2} parent=23 // pred_check
        %p268 = pneg %p87
      $region34: #{downsampler_block.2} parent=23 // pred_check_branch
        %270 = sbr.rel (%p268) target = $region36
      $region35: #{downsampler_block.2} parent=23 // pred_region
        %p271 = scmp.lt.s32.totalorder %s15, 3
        %s272 = scalar_select %p271, %s15, 3
        %s273 = smul.addr %s272, 4
        %s274 = scalar_lea.vmem %s2, %s273
      $region36: #{downsampler_block.2} parent=23 // pred_fallthru
        _
      // Predicated region
      $region37: #{downsampler_block.2} parent=23 // pred_check
        %p275 = pneg %p113
      $region38: #{downsampler_block.2} parent=23 // pred_check_branch
        %277 = sbr.rel (%p275) target = $region40
      $region39: #{downsampler_block.2} parent=23 // pred_region
        %p278 = scmp.lt.s32.totalorder %s15, 3
        %s279 = scalar_select %p278, %s15, 3
        %s280 = smul.addr %s279, 4
        %s281 = scalar_lea.vmem %s3, %s280
      $region40: #{downsampler_block.2} parent=23 // pred_fallthru
        _
    $region24: #{downsampler_block.2} parent=5 // pred_fallthru
      _
    %p282 = scmp.le.s32.totalorder 1, %s15
    %p283 = scmp.lt.s32.totalorder %s15, 5
    %p284 = pnand %p282, %p283
    %p285 = pneg %p284
    // Predicated region
    $region41: #{downsampler_block.2} parent=5 // pred_check
      _
    $region42: #{downsampler_block.2} parent=5 // pred_check_branch
      %287 = sbr.rel (%p284) target = $region44
    $region43: #{downsampler_block.2} parent=5 // pred_region
      %s288 = ssub.s32 %s15, 1
      %p289 = scmp.lt.s32.totalorder %s20, 3
      %s290 = scalar_select %p289, %s20, 3
      %s291 = smul.addr %s290, 4
      %s292 = scalar_lea.vmem %s0, %s291
      %p293 = pneg %p41
      %p294 = pneg %p38
      %p295 = scmp.lt.s32.totalorder %s20, 3
      %s296 = scalar_select %p295, %s20, 3
      %s297 = smul.addr %s296, 4
      %s298 = scalar_lea.vmem %s1, %s297
      %p299 = pneg %p67
      %p300 = pneg %p64
      %p301 = scmp.lt.s32.totalorder %s20, 3
      %s302 = scalar_select %p301, %s20, 3
      %s303 = smul.addr %s302, 4
      %s304 = scalar_lea.vmem %s2, %s303
      %p305 = pneg %p93
      %p306 = pneg %p90
      %p307 = scmp.lt.s32.totalorder %s20, 3
      %s308 = scalar_select %p307, %s20, 3
      %s309 = smul.addr %s308, 4
      %s310 = scalar_lea.vmem %s3, %s309
      %p311 = pneg %p119
      %p312 = pneg %p116
      %p313 = pneg %p140
      %p314 = pneg %p137
      %p315 = pneg %p161
      %p316 = pneg %p158
      %p317 = pneg %p187
      %p318 = pneg %p184
      %p319 = scmp.lt.s32.totalorder %s20, 3
      %s320 = scalar_select %p319, %s20, 3
      %s321 = smul.addr %s320, 8
      %s322 = scalar_lea.vmem %s6, %s321
      %p323 = pneg %p208
      %p324 = pneg %p205
      %p325 = pneg %p229
      %p326 = pneg %p226
      %p327 = scmp.lt.s32.totalorder %s20, 3
      %s328 = scalar_select %p327, %s20, 3
      %s329 = smul.addr %s328, 4
      %s330 = scalar_lea.vmem %s0, %s329
      %p331 = scmp.lt.s32.totalorder %s20, 3
      %s332 = scalar_select %p331, %s20, 3
      %s333 = smul.addr %s332, 4
      %s334 = scalar_lea.vmem %s1, %s333
      %p335 = scmp.lt.s32.totalorder %s20, 3
      %s336 = scalar_select %p335, %s20, 3
      %s337 = smul.addr %s336, 4
      %s338 = scalar_lea.vmem %s2, %s337
      %p339 = scmp.lt.s32.totalorder %s20, 3
      %s340 = scalar_select %p339, %s20, 3
      %s341 = smul.addr %s340, 4
      %s342 = scalar_lea.vmem %s3, %s341
      %p343 = scmp.lt.s32.totalorder %s20, 3
      %s344 = scalar_select %p343, %s20, 3
      %s345 = smul.addr %s344, 8
      %s346 = scalar_lea.vmem %s6, %s345
      %p347 = scmp.eq.s32.totalorder %s20, 0
      // Predicated region
      $region45: #{downsampler_block.2} parent=43 // pred_check
        %p348 = pneg %p347
      $region46: #{downsampler_block.2} parent=43 // pred_check_branch
        %350 = sbr.rel (%p348) target = $region48
      $region47: #{downsampler_block.2} parent=43 // pred_region
        %vm351 = vcmask 7168
        %352 = vst.msk [vmem:[%s7] sm:$0xff] %vm351, 0.0
        %353 = vst.msk [vmem:[%s8] sm:$0xff] %vm351, 0.0
      $region48: #{downsampler_block.2} parent=43 // pred_fallthru
        _
      %v354 = vld [vmem:[%s330] sm:$0xf]
      %v355 = vld [vmem:[%s4] sm:$0xf]
      %v356 = vld [vmem:[%s334] sm:$0xf]
      %s357 = scalar_lea.vmem %s4, 4
      %v358 = vld [vmem:[%s357] sm:$0xf]
      %vm359 = vcmask 31744
      %v361 = vsel %vm359, %v358, 0
      %vm363 = vcmask 1043456
      %v365 = vsel %vm363, %v356, 0
      %367 = vmatprep.subr.mxu0 0.0
      %368 = vmatpush1.msra.mxu0 0.0
      %369 = vmatprep.subr.mxu0 0.0
      %370 = vmatpush1.msra.mxu0 0.0
      %371 = vmatprep.subr.mxu0 0.0
      %372 = vmatpush1.msra.mxu0 0.0
      %373 = vmatprep.subr.mxu0 0.0
      %374 = vmatpush1.msra.mxu0 0.0
      %375 = vmatprep.subr.mxu0 0.0
      %376 = vmatpush1.msra.mxu0 0.0
      %377 = vmatprep.subr.mxu0 0.0
      %378 = vmatpush1.msra.mxu0 0.0
      %379 = vmatprep.subr.mxu0 0.0
      %380 = vmatpush1.msra.mxu0 0.0
      %381 = vmatprep.subr.mxu0 0.0
      %382 = vmatpush1.msra.mxu0 0.0
      %383 = vmatprep.subr.mxu0 0.0
      %384 = vmatpush1.msra.mxu0 0.0
      %385 = vmatprep.subr.mxu0 0.0
      %386 = vmatpush1.msra.mxu0 0.0
      %387 = vmatprep.subr.mxu0 0.0
      %388 = vmatpush1.msra.mxu0 0.0
      %389 = vmatprep.subr.mxu0 0.0
      %390 = vmatpush1.msra.mxu0 0.0
      %391 = vmatprep.subr.mxu0 0.0
      %392 = vmatpush1.msra.mxu0 0.0
      %393 = vmatprep.subr.mxu0 0.0
      %394 = vmatpush1.msra.mxu0 0.0
      %395 = vmatprep.subr.mxu0 0.0
      %396 = vmatpush1.msra.mxu0 0.0
      %397 = vmatprep.subr.mxu0 0.0
      %398 = vmatpush1.msra.mxu0 %v365
      %399 = vmatprep.subr.mxu0 0.0
      %400 = vmatpush2.msra.mxu0 0.0
      %401 = vmatprep.subr.mxu0 0.0
      %402 = vmatpush2.msra.mxu0 0.0
      %403 = vmatprep.subr.mxu0 0.0
      %404 = vmatpush2.msra.mxu0 0.0
      %405 = vmatprep.subr.mxu0 0.0
      %406 = vmatpush2.msra.mxu0 0.0
      %407 = vmatprep.subr.mxu0 0.0
      %408 = vmatpush2.msra.mxu0 0.0
      %409 = vmatprep.subr.mxu0 0.0
      %410 = vmatpush2.msra.mxu0 0.0
      %411 = vmatprep.subr.mxu0 0.0
      %412 = vmatpush2.msra.mxu0 0.0
      %413 = vmatprep.subr.mxu0 0.0
      %414 = vmatpush2.msra.mxu0 0.0
      %415 = vmatprep.subr.mxu0 0.0
      %416 = vmatpush2.msra.mxu0 0.0
      %417 = vmatprep.subr.mxu0 0.0
      %418 = vmatpush2.msra.mxu0 0.0
      %419 = vmatprep.subr.mxu0 0.0
      %420 = vmatpush2.msra.mxu0 0.0
      %421 = vmatprep.subr.mxu0 0.0
      %422 = vmatpush2.msra.mxu0 0.0
      %423 = vmatprep.subr.mxu0 0.0
      %424 = vmatpush2.msra.mxu0 0.0
      %425 = vmatprep.subr.mxu0 0.0
      %426 = vmatpush2.msra.mxu0 0.0
      %427 = vmatprep.subr.mxu0 0.0
      %428 = vmatpush2.msra.mxu0 0.0
      %429 = vmatprep.subr.mxu0 0.0
      %430 = vmatpush2.msra.mxu0 0.0
      %431 = vmatprep.mubr.f32.mxu0 0.0
      %432 = vmatmul.mubr.f32.gmra.mxu0 %v361
      %v433 = vpop.f32.mrf.mxu0
      %v434 = vadd.f32 0.0, %v433
      %v435 = vpop.f32.mrf.mxu0
      %436 = vdwg.mxu0
      %v438 = vsel %vm359, %v355, 0
      %v441 = vsel %vm363, %v354, 0
      %443 = vmatprep.subr.mxu0 0.0
      %444 = vmatpush1.msra.mxu0 0.0
      %445 = vmatprep.subr.mxu0 0.0
      %446 = vmatpush1.msra.mxu0 0.0
      %447 = vmatprep.subr.mxu0 0.0
      %448 = vmatpush1.msra.mxu0 0.0
      %449 = vmatprep.subr.mxu0 0.0
      %450 = vmatpush1.msra.mxu0 0.0
      %451 = vmatprep.subr.mxu0 0.0
      %452 = vmatpush1.msra.mxu0 0.0
      %453 = vmatprep.subr.mxu0 0.0
      %454 = vmatpush1.msra.mxu0 0.0
      %455 = vmatprep.subr.mxu0 0.0
      %456 = vmatpush1.msra.mxu0 0.0
      %457 = vmatprep.subr.mxu0 0.0
      %458 = vmatpush1.msra.mxu0 0.0
      %459 = vmatprep.subr.mxu0 0.0
      %460 = vmatpush1.msra.mxu0 0.0
      %461 = vmatprep.subr.mxu0 0.0
      %462 = vmatpush1.msra.mxu0 0.0
      %463 = vmatprep.subr.mxu0 0.0
      %464 = vmatpush1.msra.mxu0 0.0
      %465 = vmatprep.subr.mxu0 0.0
      %466 = vmatpush1.msra.mxu0 0.0
      %467 = vmatprep.subr.mxu0 0.0
      %468 = vmatpush1.msra.mxu0 0.0
      %469 = vmatprep.subr.mxu0 0.0
      %470 = vmatpush1.msra.mxu0 0.0
      %471 = vmatprep.subr.mxu0 0.0
      %472 = vmatpush1.msra.mxu0 0.0
      %473 = vmatprep.subr.mxu0 0.0
      %474 = vmatpush1.msra.mxu0 %v441
      %475 = vmatprep.subr.mxu0 0.0
      %476 = vmatpush2.msra.mxu0 0.0
      %477 = vmatprep.subr.mxu0 0.0
      %478 = vmatpush2.msra.mxu0 0.0
      %479 = vmatprep.subr.mxu0 0.0
      %480 = vmatpush2.msra.mxu0 0.0
      %481 = vmatprep.subr.mxu0 0.0
      %482 = vmatpush2.msra.mxu0 0.0
      %483 = vmatprep.subr.mxu0 0.0
      %484 = vmatpush2.msra.mxu0 0.0
      %485 = vmatprep.subr.mxu0 0.0
      %486 = vmatpush2.msra.mxu0 0.0
      %487 = vmatprep.subr.mxu0 0.0
      %488 = vmatpush2.msra.mxu0 0.0
      %489 = vmatprep.subr.mxu0 0.0
      %490 = vmatpush2.msra.mxu0 0.0
      %491 = vmatprep.subr.mxu0 0.0
      %492 = vmatpush2.msra.mxu0 0.0
      %493 = vmatprep.subr.mxu0 0.0
      %494 = vmatpush2.msra.mxu0 0.0
      %495 = vmatprep.subr.mxu0 0.0
      %496 = vmatpush2.msra.mxu0 0.0
      %497 = vmatprep.subr.mxu0 0.0
      %498 = vmatpush2.msra.mxu0 0.0
      %499 = vmatprep.subr.mxu0 0.0
      %500 = vmatpush2.msra.mxu0 0.0
      %501 = vmatprep.subr.mxu0 0.0
      %502 = vmatpush2.msra.mxu0 0.0
      %503 = vmatprep.subr.mxu0 0.0
      %504 = vmatpush2.msra.mxu0 0.0
      %505 = vmatprep.subr.mxu0 0.0
      %506 = vmatpush2.msra.mxu0 0.0
      %507 = vmatprep.mubr.f32.mxu0 0.0
      %508 = vmatmul.mubr.f32.gmra.mxu0 %v438
      %v509 = vpop.f32.mrf.mxu0
      %v510 = vadd.f32 %v434, %v509
      %v511 = vpop.f32.mrf.mxu0
      %512 = vdwg.mxu0
      %s513 = scalar_lea.vmem %s4, 8
      %v514 = vld [vmem:[%s513] sm:$0xf]
      %515 = vrot.lane.b32.xlu0 %v354, 127
      %v516 = vpop.permute.xlu0 %515
      %v518 = vsel %vm359, %v514, 0
      %v520 = vsel %vm363, %v516, 0
      %522 = vmatprep.subr.mxu0 0.0
      %523 = vmatpush1.msra.mxu0 0.0
      %524 = vmatprep.subr.mxu0 0.0
      %525 = vmatpush1.msra.mxu0 0.0
      %526 = vmatprep.subr.mxu0 0.0
      %527 = vmatpush1.msra.mxu0 0.0
      %528 = vmatprep.subr.mxu0 0.0
      %529 = vmatpush1.msra.mxu0 0.0
      %530 = vmatprep.subr.mxu0 0.0
      %531 = vmatpush1.msra.mxu0 0.0
      %532 = vmatprep.subr.mxu0 0.0
      %533 = vmatpush1.msra.mxu0 0.0
      %534 = vmatprep.subr.mxu0 0.0
      %535 = vmatpush1.msra.mxu0 0.0
      %536 = vmatprep.subr.mxu0 0.0
      %537 = vmatpush1.msra.mxu0 0.0
      %538 = vmatprep.subr.mxu0 0.0
      %539 = vmatpush1.msra.mxu0 0.0
      %540 = vmatprep.subr.mxu0 0.0
      %541 = vmatpush1.msra.mxu0 0.0
      %542 = vmatprep.subr.mxu0 0.0
      %543 = vmatpush1.msra.mxu0 0.0
      %544 = vmatprep.subr.mxu0 0.0
      %545 = vmatpush1.msra.mxu0 0.0
      %546 = vmatprep.subr.mxu0 0.0
      %547 = vmatpush1.msra.mxu0 0.0
      %548 = vmatprep.subr.mxu0 0.0
      %549 = vmatpush1.msra.mxu0 0.0
      %550 = vmatprep.subr.mxu0 0.0
      %551 = vmatpush1.msra.mxu0 0.0
      %552 = vmatprep.subr.mxu0 0.0
      %553 = vmatpush1.msra.mxu0 %v520
      %554 = vmatprep.subr.mxu0 0.0
      %555 = vmatpush2.msra.mxu0 0.0
      %556 = vmatprep.subr.mxu0 0.0
      %557 = vmatpush2.msra.mxu0 0.0
      %558 = vmatprep.subr.mxu0 0.0
      %559 = vmatpush2.msra.mxu0 0.0
      %560 = vmatprep.subr.mxu0 0.0
      %561 = vmatpush2.msra.mxu0 0.0
      %562 = vmatprep.subr.mxu0 0.0
      %563 = vmatpush2.msra.mxu0 0.0
      %564 = vmatprep.subr.mxu0 0.0
      %565 = vmatpush2.msra.mxu0 0.0
      %566 = vmatprep.subr.mxu0 0.0
      %567 = vmatpush2.msra.mxu0 0.0
      %568 = vmatprep.subr.mxu0 0.0
      %569 = vmatpush2.msra.mxu0 0.0
      %570 = vmatprep.subr.mxu0 0.0
      %571 = vmatpush2.msra.mxu0 0.0
      %572 = vmatprep.subr.mxu0 0.0
      %573 = vmatpush2.msra.mxu0 0.0
      %574 = vmatprep.subr.mxu0 0.0
      %575 = vmatpush2.msra.mxu0 0.0
      %576 = vmatprep.subr.mxu0 0.0
      %577 = vmatpush2.msra.mxu0 0.0
      %578 = vmatprep.subr.mxu0 0.0
      %579 = vmatpush2.msra.mxu0 0.0
      %580 = vmatprep.subr.mxu0 0.0
      %581 = vmatpush2.msra.mxu0 0.0
      %582 = vmatprep.subr.mxu0 0.0
      %583 = vmatpush2.msra.mxu0 0.0
      %584 = vmatprep.subr.mxu0 0.0
      %585 = vmatpush2.msra.mxu0 0.0
      %586 = vmatprep.mubr.f32.mxu0 0.0
      %587 = vmatmul.mubr.f32.gmra.mxu0 %v518
      %v588 = vpop.f32.mrf.mxu0
      %v589 = vadd.f32 0.0, %v588
      %v590 = vpop.f32.mrf.mxu0
      %591 = vdwg.mxu0
      %v592 = vadd.f32 %v510, %v589
      %v593 = vld [vmem:[%s338] sm:$0xf]
      %s594 = scalar_lea.vmem %s4, 12
      %v595 = vld [vmem:[%s594] sm:$0xf]
      %v597 = vsel %vm359, %v595, 0
      %v600 = vsel %vm363, %v593, 0
      %602 = vmatprep.subr.mxu0 0.0
      %603 = vmatpush1.msra.mxu0 0.0
      %604 = vmatprep.subr.mxu0 0.0
      %605 = vmatpush1.msra.mxu0 0.0
      %606 = vmatprep.subr.mxu0 0.0
      %607 = vmatpush1.msra.mxu0 0.0
      %608 = vmatprep.subr.mxu0 0.0
      %609 = vmatpush1.msra.mxu0 0.0
      %610 = vmatprep.subr.mxu0 0.0
      %611 = vmatpush1.msra.mxu0 0.0
      %612 = vmatprep.subr.mxu0 0.0
      %613 = vmatpush1.msra.mxu0 0.0
      %614 = vmatprep.subr.mxu0 0.0
      %615 = vmatpush1.msra.mxu0 0.0
      %616 = vmatprep.subr.mxu0 0.0
      %617 = vmatpush1.msra.mxu0 0.0
      %618 = vmatprep.subr.mxu0 0.0
      %619 = vmatpush1.msra.mxu0 0.0
      %620 = vmatprep.subr.mxu0 0.0
      %621 = vmatpush1.msra.mxu0 0.0
      %622 = vmatprep.subr.mxu0 0.0
      %623 = vmatpush1.msra.mxu0 0.0
      %624 = vmatprep.subr.mxu0 0.0
      %625 = vmatpush1.msra.mxu0 0.0
      %626 = vmatprep.subr.mxu0 0.0
      %627 = vmatpush1.msra.mxu0 0.0
      %628 = vmatprep.subr.mxu0 0.0
      %629 = vmatpush1.msra.mxu0 0.0
      %630 = vmatprep.subr.mxu0 0.0
      %631 = vmatpush1.msra.mxu0 0.0
      %632 = vmatprep.subr.mxu0 0.0
      %633 = vmatpush1.msra.mxu0 %v600
      %634 = vmatprep.subr.mxu0 0.0
      %635 = vmatpush2.msra.mxu0 0.0
      %636 = vmatprep.subr.mxu0 0.0
      %637 = vmatpush2.msra.mxu0 0.0
      %638 = vmatprep.subr.mxu0 0.0
      %639 = vmatpush2.msra.mxu0 0.0
      %640 = vmatprep.subr.mxu0 0.0
      %641 = vmatpush2.msra.mxu0 0.0
      %642 = vmatprep.subr.mxu0 0.0
      %643 = vmatpush2.msra.mxu0 0.0
      %644 = vmatprep.subr.mxu0 0.0
      %645 = vmatpush2.msra.mxu0 0.0
      %646 = vmatprep.subr.mxu0 0.0
      %647 = vmatpush2.msra.mxu0 0.0
      %648 = vmatprep.subr.mxu0 0.0
      %649 = vmatpush2.msra.mxu0 0.0
      %650 = vmatprep.subr.mxu0 0.0
      %651 = vmatpush2.msra.mxu0 0.0
      %652 = vmatprep.subr.mxu0 0.0
      %653 = vmatpush2.msra.mxu0 0.0
      %654 = vmatprep.subr.mxu0 0.0
      %655 = vmatpush2.msra.mxu0 0.0
      %656 = vmatprep.subr.mxu0 0.0
      %657 = vmatpush2.msra.mxu0 0.0
      %658 = vmatprep.subr.mxu0 0.0
      %659 = vmatpush2.msra.mxu0 0.0
      %660 = vmatprep.subr.mxu0 0.0
      %661 = vmatpush2.msra.mxu0 0.0
      %662 = vmatprep.subr.mxu0 0.0
      %663 = vmatpush2.msra.mxu0 0.0
      %664 = vmatprep.subr.mxu0 0.0
      %665 = vmatpush2.msra.mxu0 0.0
      %666 = vmatprep.mubr.f32.mxu0 0.0
      %667 = vmatmul.mubr.f32.gmra.mxu0 %v597
      %v668 = vpop.f32.mrf.mxu0
      %v669 = vadd.f32 0.0, %v668
      %v670 = vpop.f32.mrf.mxu0
      %671 = vdwg.mxu0
      %v672 = vadd.f32 %v592, %v669
      %v673 = vld [vmem:[%s342] sm:$0xf]
      %s674 = scalar_lea.vmem %s4, 16
      %v675 = vld [vmem:[%s674] sm:$0xf]
      %v677 = vsel %vm359, %v675, 0
      %v680 = vsel %vm363, %v673, 0
      %682 = vmatprep.subr.mxu0 0.0
      %683 = vmatpush1.msra.mxu0 0.0
      %684 = vmatprep.subr.mxu0 0.0
      %685 = vmatpush1.msra.mxu0 0.0
      %686 = vmatprep.subr.mxu0 0.0
      %687 = vmatpush1.msra.mxu0 0.0
      %688 = vmatprep.subr.mxu0 0.0
      %689 = vmatpush1.msra.mxu0 0.0
      %690 = vmatprep.subr.mxu0 0.0
      %691 = vmatpush1.msra.mxu0 0.0
      %692 = vmatprep.subr.mxu0 0.0
      %693 = vmatpush1.msra.mxu0 0.0
      %694 = vmatprep.subr.mxu0 0.0
      %695 = vmatpush1.msra.mxu0 0.0
      %696 = vmatprep.subr.mxu0 0.0
      %697 = vmatpush1.msra.mxu0 0.0
      %698 = vmatprep.subr.mxu0 0.0
      %699 = vmatpush1.msra.mxu0 0.0
      %700 = vmatprep.subr.mxu0 0.0
      %701 = vmatpush1.msra.mxu0 0.0
      %702 = vmatprep.subr.mxu0 0.0
      %703 = vmatpush1.msra.mxu0 0.0
      %704 = vmatprep.subr.mxu0 0.0
      %705 = vmatpush1.msra.mxu0 0.0
      %706 = vmatprep.subr.mxu0 0.0
      %707 = vmatpush1.msra.mxu0 0.0
      %708 = vmatprep.subr.mxu0 0.0
      %709 = vmatpush1.msra.mxu0 0.0
      %710 = vmatprep.subr.mxu0 0.0
      %711 = vmatpush1.msra.mxu0 0.0
      %712 = vmatprep.subr.mxu0 0.0
      %713 = vmatpush1.msra.mxu0 %v680
      %714 = vmatprep.subr.mxu0 0.0
      %715 = vmatpush2.msra.mxu0 0.0
      %716 = vmatprep.subr.mxu0 0.0
      %717 = vmatpush2.msra.mxu0 0.0
      %718 = vmatprep.subr.mxu0 0.0
      %719 = vmatpush2.msra.mxu0 0.0
      %720 = vmatprep.subr.mxu0 0.0
      %721 = vmatpush2.msra.mxu0 0.0
      %722 = vmatprep.subr.mxu0 0.0
      %723 = vmatpush2.msra.mxu0 0.0
      %724 = vmatprep.subr.mxu0 0.0
      %725 = vmatpush2.msra.mxu0 0.0
      %726 = vmatprep.subr.mxu0 0.0
      %727 = vmatpush2.msra.mxu0 0.0
      %728 = vmatprep.subr.mxu0 0.0
      %729 = vmatpush2.msra.mxu0 0.0
      %730 = vmatprep.subr.mxu0 0.0
      %731 = vmatpush2.msra.mxu0 0.0
      %732 = vmatprep.subr.mxu0 0.0
      %733 = vmatpush2.msra.mxu0 0.0
      %734 = vmatprep.subr.mxu0 0.0
      %735 = vmatpush2.msra.mxu0 0.0
      %736 = vmatprep.subr.mxu0 0.0
      %737 = vmatpush2.msra.mxu0 0.0
      %738 = vmatprep.subr.mxu0 0.0
      %739 = vmatpush2.msra.mxu0 0.0
      %740 = vmatprep.subr.mxu0 0.0
      %741 = vmatpush2.msra.mxu0 0.0
      %742 = vmatprep.subr.mxu0 0.0
      %743 = vmatpush2.msra.mxu0 0.0
      %744 = vmatprep.subr.mxu0 0.0
      %745 = vmatpush2.msra.mxu0 0.0
      %746 = vmatprep.mubr.f32.mxu0 0.0
      %747 = vmatmul.mubr.f32.gmra.mxu0 %v677
      %v748 = vpop.f32.mrf.mxu0
      %v749 = vadd.f32 0.0, %v748
      %v750 = vpop.f32.mrf.mxu0
      %751 = vdwg.mxu0
      %v752 = vadd.f32 %v672, %v749
      %s753 = scalar_lea.vmem %s4, 20
      %v754 = vld [vmem:[%s753] sm:$0xf]
      %755 = vrot.lane.b32.xlu0 %v593, 127
      %v756 = vpop.permute.xlu0 %755
      %v758 = vsel %vm359, %v754, 0
      %v760 = vsel %vm363, %v756, 0
      %762 = vmatprep.subr.mxu0 0.0
      %763 = vmatpush1.msra.mxu0 0.0
      %764 = vmatprep.subr.mxu0 0.0
      %765 = vmatpush1.msra.mxu0 0.0
      %766 = vmatprep.subr.mxu0 0.0
      %767 = vmatpush1.msra.mxu0 0.0
      %768 = vmatprep.subr.mxu0 0.0
      %769 = vmatpush1.msra.mxu0 0.0
      %770 = vmatprep.subr.mxu0 0.0
      %771 = vmatpush1.msra.mxu0 0.0
      %772 = vmatprep.subr.mxu0 0.0
      %773 = vmatpush1.msra.mxu0 0.0
      %774 = vmatprep.subr.mxu0 0.0
      %775 = vmatpush1.msra.mxu0 0.0
      %776 = vmatprep.subr.mxu0 0.0
      %777 = vmatpush1.msra.mxu0 0.0
      %778 = vmatprep.subr.mxu0 0.0
      %779 = vmatpush1.msra.mxu0 0.0
      %780 = vmatprep.subr.mxu0 0.0
      %781 = vmatpush1.msra.mxu0 0.0
      %782 = vmatprep.subr.mxu0 0.0
      %783 = vmatpush1.msra.mxu0 0.0
      %784 = vmatprep.subr.mxu0 0.0
      %785 = vmatpush1.msra.mxu0 0.0
      %786 = vmatprep.subr.mxu0 0.0
      %787 = vmatpush1.msra.mxu0 0.0
      %788 = vmatprep.subr.mxu0 0.0
      %789 = vmatpush1.msra.mxu0 0.0
      %790 = vmatprep.subr.mxu0 0.0
      %791 = vmatpush1.msra.mxu0 0.0
      %792 = vmatprep.subr.mxu0 0.0
      %793 = vmatpush1.msra.mxu0 %v760
      %794 = vmatprep.subr.mxu0 0.0
      %795 = vmatpush2.msra.mxu0 0.0
      %796 = vmatprep.subr.mxu0 0.0
      %797 = vmatpush2.msra.mxu0 0.0
      %798 = vmatprep.subr.mxu0 0.0
      %799 = vmatpush2.msra.mxu0 0.0
      %800 = vmatprep.subr.mxu0 0.0
      %801 = vmatpush2.msra.mxu0 0.0
      %802 = vmatprep.subr.mxu0 0.0
      %803 = vmatpush2.msra.mxu0 0.0
      %804 = vmatprep.subr.mxu0 0.0
      %805 = vmatpush2.msra.mxu0 0.0
      %806 = vmatprep.subr.mxu0 0.0
      %807 = vmatpush2.msra.mxu0 0.0
      %808 = vmatprep.subr.mxu0 0.0
      %809 = vmatpush2.msra.mxu0 0.0
      %810 = vmatprep.subr.mxu0 0.0
      %811 = vmatpush2.msra.mxu0 0.0
      %812 = vmatprep.subr.mxu0 0.0
      %813 = vmatpush2.msra.mxu0 0.0
      %814 = vmatprep.subr.mxu0 0.0
      %815 = vmatpush2.msra.mxu0 0.0
      %816 = vmatprep.subr.mxu0 0.0
      %817 = vmatpush2.msra.mxu0 0.0
      %818 = vmatprep.subr.mxu0 0.0
      %819 = vmatpush2.msra.mxu0 0.0
      %820 = vmatprep.subr.mxu0 0.0
      %821 = vmatpush2.msra.mxu0 0.0
      %822 = vmatprep.subr.mxu0 0.0
      %823 = vmatpush2.msra.mxu0 0.0
      %824 = vmatprep.subr.mxu0 0.0
      %825 = vmatpush2.msra.mxu0 0.0
      %826 = vmatprep.mubr.f32.mxu0 0.0
      %827 = vmatmul.mubr.f32.gmra.mxu0 %v758
      %v828 = vpop.f32.mrf.mxu0
      %v829 = vadd.f32 0.0, %v828
      %v830 = vpop.f32.mrf.mxu0
      %831 = vdwg.mxu0
      %v832 = vadd.f32 %v752, %v829
      %s833 = scalar_lea.vmem %s4, 24
      %v834 = vld [vmem:[%s833] sm:$0xf]
      %835 = vrot.lane.b32.xlu0 %v354, 119
      %v836 = vpop.permute.xlu0 %835
      %v838 = vsel %vm359, %v834, 0
      %v840 = vsel %vm363, %v836, 0
      %842 = vmatprep.subr.mxu0 0.0
      %843 = vmatpush1.msra.mxu0 0.0
      %844 = vmatprep.subr.mxu0 0.0
      %845 = vmatpush1.msra.mxu0 0.0
      %846 = vmatprep.subr.mxu0 0.0
      %847 = vmatpush1.msra.mxu0 0.0
      %848 = vmatprep.subr.mxu0 0.0
      %849 = vmatpush1.msra.mxu0 0.0
      %850 = vmatprep.subr.mxu0 0.0
      %851 = vmatpush1.msra.mxu0 0.0
      %852 = vmatprep.subr.mxu0 0.0
      %853 = vmatpush1.msra.mxu0 0.0
      %854 = vmatprep.subr.mxu0 0.0
      %855 = vmatpush1.msra.mxu0 0.0
      %856 = vmatprep.subr.mxu0 0.0
      %857 = vmatpush1.msra.mxu0 0.0
      %858 = vmatprep.subr.mxu0 0.0
      %859 = vmatpush1.msra.mxu0 0.0
      %860 = vmatprep.subr.mxu0 0.0
      %861 = vmatpush1.msra.mxu0 0.0
      %862 = vmatprep.subr.mxu0 0.0
      %863 = vmatpush1.msra.mxu0 0.0
      %864 = vmatprep.subr.mxu0 0.0
      %865 = vmatpush1.msra.mxu0 0.0
      %866 = vmatprep.subr.mxu0 0.0
      %867 = vmatpush1.msra.mxu0 0.0
      %868 = vmatprep.subr.mxu0 0.0
      %869 = vmatpush1.msra.mxu0 0.0
      %870 = vmatprep.subr.mxu0 0.0
      %871 = vmatpush1.msra.mxu0 0.0
      %872 = vmatprep.subr.mxu0 0.0
      %873 = vmatpush1.msra.mxu0 %v840
      %874 = vmatprep.subr.mxu0 0.0
      %875 = vmatpush2.msra.mxu0 0.0
      %876 = vmatprep.subr.mxu0 0.0
      %877 = vmatpush2.msra.mxu0 0.0
      %878 = vmatprep.subr.mxu0 0.0
      %879 = vmatpush2.msra.mxu0 0.0
      %880 = vmatprep.subr.mxu0 0.0
      %881 = vmatpush2.msra.mxu0 0.0
      %882 = vmatprep.subr.mxu0 0.0
      %883 = vmatpush2.msra.mxu0 0.0
      %884 = vmatprep.subr.mxu0 0.0
      %885 = vmatpush2.msra.mxu0 0.0
      %886 = vmatprep.subr.mxu0 0.0
      %887 = vmatpush2.msra.mxu0 0.0
      %888 = vmatprep.subr.mxu0 0.0
      %889 = vmatpush2.msra.mxu0 0.0
      %890 = vmatprep.subr.mxu0 0.0
      %891 = vmatpush2.msra.mxu0 0.0
      %892 = vmatprep.subr.mxu0 0.0
      %893 = vmatpush2.msra.mxu0 0.0
      %894 = vmatprep.subr.mxu0 0.0
      %895 = vmatpush2.msra.mxu0 0.0
      %896 = vmatprep.subr.mxu0 0.0
      %897 = vmatpush2.msra.mxu0 0.0
      %898 = vmatprep.subr.mxu0 0.0
      %899 = vmatpush2.msra.mxu0 0.0
      %900 = vmatprep.subr.mxu0 0.0
      %901 = vmatpush2.msra.mxu0 0.0
      %902 = vmatprep.subr.mxu0 0.0
      %903 = vmatpush2.msra.mxu0 0.0
      %904 = vmatprep.subr.mxu0 0.0
      %905 = vmatpush2.msra.mxu0 0.0
      %906 = vmatprep.mubr.f32.mxu0 0.0
      %907 = vmatmul.mubr.f32.gmra.mxu0 %v838
      %v908 = vpop.f32.mrf.mxu0
      %v909 = vadd.f32 0.0, %v908
      %v910 = vpop.f32.mrf.mxu0
      %911 = vdwg.mxu0
      %v912 = vadd.f32 %v832, %v909
      %s913 = scalar_lea.vmem %s4, 28
      %v914 = vld [vmem:[%s913] sm:$0xf]
      %915 = vrot.lane.b32.xlu0 %v356, 119
      %v916 = vpop.permute.xlu0 %915
      %v918 = vsel %vm359, %v914, 0
      %v920 = vsel %vm363, %v916, 0
      %922 = vmatprep.subr.mxu0 0.0
      %923 = vmatpush1.msra.mxu0 0.0
      %924 = vmatprep.subr.mxu0 0.0
      %925 = vmatpush1.msra.mxu0 0.0
      %926 = vmatprep.subr.mxu0 0.0
      %927 = vmatpush1.msra.mxu0 0.0
      %928 = vmatprep.subr.mxu0 0.0
      %929 = vmatpush1.msra.mxu0 0.0
      %930 = vmatprep.subr.mxu0 0.0
      %931 = vmatpush1.msra.mxu0 0.0
      %932 = vmatprep.subr.mxu0 0.0
      %933 = vmatpush1.msra.mxu0 0.0
      %934 = vmatprep.subr.mxu0 0.0
      %935 = vmatpush1.msra.mxu0 0.0
      %936 = vmatprep.subr.mxu0 0.0
      %937 = vmatpush1.msra.mxu0 0.0
      %938 = vmatprep.subr.mxu0 0.0
      %939 = vmatpush1.msra.mxu0 0.0
      %940 = vmatprep.subr.mxu0 0.0
      %941 = vmatpush1.msra.mxu0 0.0
      %942 = vmatprep.subr.mxu0 0.0
      %943 = vmatpush1.msra.mxu0 0.0
      %944 = vmatprep.subr.mxu0 0.0
      %945 = vmatpush1.msra.mxu0 0.0
      %946 = vmatprep.subr.mxu0 0.0
      %947 = vmatpush1.msra.mxu0 0.0
      %948 = vmatprep.subr.mxu0 0.0
      %949 = vmatpush1.msra.mxu0 0.0
      %950 = vmatprep.subr.mxu0 0.0
      %951 = vmatpush1.msra.mxu0 0.0
      %952 = vmatprep.subr.mxu0 0.0
      %953 = vmatpush1.msra.mxu0 %v920
      %954 = vmatprep.subr.mxu0 0.0
      %955 = vmatpush2.msra.mxu0 0.0
      %956 = vmatprep.subr.mxu0 0.0
      %957 = vmatpush2.msra.mxu0 0.0
      %958 = vmatprep.subr.mxu0 0.0
      %959 = vmatpush2.msra.mxu0 0.0
      %960 = vmatprep.subr.mxu0 0.0
      %961 = vmatpush2.msra.mxu0 0.0
      %962 = vmatprep.subr.mxu0 0.0
      %963 = vmatpush2.msra.mxu0 0.0
      %964 = vmatprep.subr.mxu0 0.0
      %965 = vmatpush2.msra.mxu0 0.0
      %966 = vmatprep.subr.mxu0 0.0
      %967 = vmatpush2.msra.mxu0 0.0
      %968 = vmatprep.subr.mxu0 0.0
      %969 = vmatpush2.msra.mxu0 0.0
      %970 = vmatprep.subr.mxu0 0.0
      %971 = vmatpush2.msra.mxu0 0.0
      %972 = vmatprep.subr.mxu0 0.0
      %973 = vmatpush2.msra.mxu0 0.0
      %974 = vmatprep.subr.mxu0 0.0
      %975 = vmatpush2.msra.mxu0 0.0
      %976 = vmatprep.subr.mxu0 0.0
      %977 = vmatpush2.msra.mxu0 0.0
      %978 = vmatprep.subr.mxu0 0.0
      %979 = vmatpush2.msra.mxu0 0.0
      %980 = vmatprep.subr.mxu0 0.0
      %981 = vmatpush2.msra.mxu0 0.0
      %982 = vmatprep.subr.mxu0 0.0
      %983 = vmatpush2.msra.mxu0 0.0
      %984 = vmatprep.subr.mxu0 0.0
      %985 = vmatpush2.msra.mxu0 0.0
      %986 = vmatprep.mubr.f32.mxu0 0.0
      %987 = vmatmul.mubr.f32.gmra.mxu0 %v918
      %v988 = vpop.f32.mrf.mxu0
      %v989 = vadd.f32 0.0, %v988
      %v990 = vpop.f32.mrf.mxu0
      %991 = vdwg.mxu0
      %v992 = vadd.f32 %v912, %v989
      %s993 = scalar_lea.vmem %s4, 32
      %v994 = vld [vmem:[%s993] sm:$0xf]
      %995 = vrot.lane.b32.xlu0 %v354, 118
      %v996 = vpop.permute.xlu0 %995
      %v998 = vsel %vm359, %v994, 0
      %v1000 = vsel %vm363, %v996, 0
      %1002 = vmatprep.subr.mxu0 0.0
      %1003 = vmatpush1.msra.mxu0 0.0
      %1004 = vmatprep.subr.mxu0 0.0
      %1005 = vmatpush1.msra.mxu0 0.0
      %1006 = vmatprep.subr.mxu0 0.0
      %1007 = vmatpush1.msra.mxu0 0.0
      %1008 = vmatprep.subr.mxu0 0.0
      %1009 = vmatpush1.msra.mxu0 0.0
      %1010 = vmatprep.subr.mxu0 0.0
      %1011 = vmatpush1.msra.mxu0 0.0
      %1012 = vmatprep.subr.mxu0 0.0
      %1013 = vmatpush1.msra.mxu0 0.0
      %1014 = vmatprep.subr.mxu0 0.0
      %1015 = vmatpush1.msra.mxu0 0.0
      %1016 = vmatprep.subr.mxu0 0.0
      %1017 = vmatpush1.msra.mxu0 0.0
      %1018 = vmatprep.subr.mxu0 0.0
      %1019 = vmatpush1.msra.mxu0 0.0
      %1020 = vmatprep.subr.mxu0 0.0
      %1021 = vmatpush1.msra.mxu0 0.0
      %1022 = vmatprep.subr.mxu0 0.0
      %1023 = vmatpush1.msra.mxu0 0.0
      %1024 = vmatprep.subr.mxu0 0.0
      %1025 = vmatpush1.msra.mxu0 0.0
      %1026 = vmatprep.subr.mxu0 0.0
      %1027 = vmatpush1.msra.mxu0 0.0
      %1028 = vmatprep.subr.mxu0 0.0
      %1029 = vmatpush1.msra.mxu0 0.0
      %1030 = vmatprep.subr.mxu0 0.0
      %1031 = vmatpush1.msra.mxu0 0.0
      %1032 = vmatprep.subr.mxu0 0.0
      %1033 = vmatpush1.msra.mxu0 %v1000
      %1034 = vmatprep.subr.mxu0 0.0
      %1035 = vmatpush2.msra.mxu0 0.0
      %1036 = vmatprep.subr.mxu0 0.0
      %1037 = vmatpush2.msra.mxu0 0.0
      %1038 = vmatprep.subr.mxu0 0.0
      %1039 = vmatpush2.msra.mxu0 0.0
      %1040 = vmatprep.subr.mxu0 0.0
      %1041 = vmatpush2.msra.mxu0 0.0
      %1042 = vmatprep.subr.mxu0 0.0
      %1043 = vmatpush2.msra.mxu0 0.0
      %1044 = vmatprep.subr.mxu0 0.0
      %1045 = vmatpush2.msra.mxu0 0.0
      %1046 = vmatprep.subr.mxu0 0.0
      %1047 = vmatpush2.msra.mxu0 0.0
      %1048 = vmatprep.subr.mxu0 0.0
      %1049 = vmatpush2.msra.mxu0 0.0
      %1050 = vmatprep.subr.mxu0 0.0
      %1051 = vmatpush2.msra.mxu0 0.0
      %1052 = vmatprep.subr.mxu0 0.0
      %1053 = vmatpush2.msra.mxu0 0.0
      %1054 = vmatprep.subr.mxu0 0.0
      %1055 = vmatpush2.msra.mxu0 0.0
      %1056 = vmatprep.subr.mxu0 0.0
      %1057 = vmatpush2.msra.mxu0 0.0
      %1058 = vmatprep.subr.mxu0 0.0
      %1059 = vmatpush2.msra.mxu0 0.0
      %1060 = vmatprep.subr.mxu0 0.0
      %1061 = vmatpush2.msra.mxu0 0.0
      %1062 = vmatprep.subr.mxu0 0.0
      %1063 = vmatpush2.msra.mxu0 0.0
      %1064 = vmatprep.subr.mxu0 0.0
      %1065 = vmatpush2.msra.mxu0 0.0
      %1066 = vmatprep.mubr.f32.mxu0 0.0
      %1067 = vmatmul.mubr.f32.gmra.mxu0 %v998
      %v1068 = vpop.f32.mrf.mxu0
      %v1069 = vadd.f32 0.0, %v1068
      %v1070 = vpop.f32.mrf.mxu0
      %1071 = vdwg.mxu0
      %v1072 = vadd.f32 %v992, %v1069
      %v1074 = vmax.f32 %v673, %v756
      %v1076 = vmax.f32 %v356, %v516
      %1078 = vrot.lane.b32.xlu0 %v1076, 119
      %v1079 = vpop.permute.xlu0 %1078
      %v1081 = vmax.f32 %v1074, %v1079
      %v1083 = vrot.slane %v1081, 4
      %v1085 = vsel %vm363, %v1072, %v1083
      %v1086 = vld [vmem:[%s5] sm:$0x1]
      %v1088 = vlaneseq
      %v1089 = vshrl.u32 %v1088, 7
      %v1090 = vsub.s32 0, %v1089
      %v1091 = vrot.slane %v1086, %v1090
      %v1093 = vmul.f32 %v1085, %v1091
      %vm1094 = vcmask 285696
      %1095 = vst.msk [vmem:[%s346] sm:$0xff] %vm1094, %v1093
      %vm1096 = vcmask 367896
      %1097 = vst.msk [vmem:[%s346] sm:$0xff] %vm1096, 0.0
      %v1098 = vld [vmem:[%s7] sm:$0xff]
      %v1099 = vsel %vm1094, %v1093, 0.0
      %1100 = vadd.xlane.f32.xlu0 %v1099
      %v1101 = vpop.xlane.xlu0 %1100
      %v1102 = vadd.f32 %v1098, %v1101
      %vm1103 = vcmask 7168
      %1104 = vst.msk [vmem:[%s7] sm:$0xff] %vm1103, %v1102
      %v1105 = vld [vmem:[%s8] sm:$0xff]
      %v1106 = vmul.f32 %v1093, %v1093
      %v1107 = vsel %vm1094, %v1106, 0.0
      %1108 = vadd.xlane.f32.xlu0 %v1107
      %v1109 = vpop.xlane.xlu0 %1108
      %v1110 = vadd.f32 %v1105, %v1109
      %1111 = vst.msk [vmem:[%s8] sm:$0xff] %vm1103, %v1110
      %p1112 = scmp.lt.s32.totalorder %s20, 3
      %s1113 = scalar_select %p1112, %s20, 3
      %s1114 = smul.addr %s1113, 8
      %s1115 = scalar_lea.vmem %s6, %s1114
      // Predicated region
      $region49: #{downsampler_block.2} parent=43 // pred_check
        %p1116 = pneg %p184
      $region50: #{downsampler_block.2} parent=43 // pred_check_branch
        %1118 = sbr.rel (%p1116) target = $region52
      $region51: #{downsampler_block.2} parent=43 // pred_region
        _
      $region52: #{downsampler_block.2} parent=43 // pred_fallthru
        _
      // Predicated region
      $region53: #{downsampler_block.2} parent=43 // pred_check
        %p1119 = pneg %p205
      $region54: #{downsampler_block.2} parent=43 // pred_check_branch
        %1121 = sbr.rel (%p1119) target = $region56
      $region55: #{downsampler_block.2} parent=43 // pred_region
        _
      $region56: #{downsampler_block.2} parent=43 // pred_fallthru
        _
      // Predicated region
      $region57: #{downsampler_block.2} parent=43 // pred_check
        %p1122 = pneg %p226
      $region58: #{downsampler_block.2} parent=43 // pred_check_branch
        %1124 = sbr.rel (%p1122) target = $region60
      $region59: #{downsampler_block.2} parent=43 // pred_region
        _
      $region60: #{downsampler_block.2} parent=43 // pred_fallthru
        _
      // Predicated region
      $region61: #{downsampler_block.2} parent=43 // pred_check
        %p1125 = pneg %p205
      $region62: #{downsampler_block.2} parent=43 // pred_check_branch
        %1127 = sbr.rel (%p1125) target = $region64
      $region63: #{downsampler_block.2} parent=43 // pred_region
        _
      $region64: #{downsampler_block.2} parent=43 // pred_fallthru
        _
      // Predicated region
      $region65: #{downsampler_block.2} parent=43 // pred_check
        %p1128 = pneg %p226
      $region66: #{downsampler_block.2} parent=43 // pred_check_branch
        %1130 = sbr.rel (%p1128) target = $region68
      $region67: #{downsampler_block.2} parent=43 // pred_region
        _
      $region68: #{downsampler_block.2} parent=43 // pred_fallthru
        _
    $region44: #{downsampler_block.2} parent=5 // pred_fallthru
      _
    %p1131 = scmp.le.s32.totalorder 2, %s15
    // Predicated region
    $region69: #{downsampler_block.2} parent=5 // pred_check
      %p1132 = pneg %p1131
    $region70: #{downsampler_block.2} parent=5 // pred_check_branch
      %1134 = sbr.rel (%p1132) target = $region72
    $region71: #{downsampler_block.2} parent=5 // pred_region
      %s1135 = ssub.s32 %s15, 2
      // Predicated region
      $region73: #{downsampler_block.2} parent=71 // pred_check
        %p1136 = pneg %p190
      $region74: #{downsampler_block.2} parent=71 // pred_check_branch
        %1138 = sbr.rel (%p1136) target = $region76
      $region75: #{downsampler_block.2} parent=71 // pred_region
        %p1139 = scmp.lt.s32.totalorder %s21, 3
        %s1140 = scalar_select %p1139, %s21, 3
        %s1141 = smul.addr %s1140, 8
        %s1142 = scalar_lea.vmem %s6, %s1141
      $region76: #{downsampler_block.2} parent=71 // pred_fallthru
        _
    $region72: #{downsampler_block.2} parent=5 // pred_fallthru
      _
  $region6: #{downsampler_block.2} parent=0 // loop_footer
    %s19 = sadd.s32 1, %s15
  $region7: #{downsampler_block.2} parent=0 // loop_footer_branch
    %14 = sbr.rel target = $region3
  $region8: #{downsampler_block.2} parent=0 // loop_exit
    _

</llo_original>
